<compile_context>
chip_gen: v7x
topology: tpu7x:2x2x1
jax: 0.10.0
libtpu: 0.0.40
codegen_flags: <defaults>
</compile_context>

<pallas_src>
import functools

import jax
import jax.numpy as jnp
from jax.experimental import pallas as pl
from jax.experimental.pallas import tpu as pltpu

# ----------------------------- model config ---------------------------------
NUM_BLOCKS = 2
IN_DIM = 16
HIDDEN = 32
OUT_DIM = 8
OUT_PAD = 128          # lane-dense padded output width (sliced back to OUT_DIM)
BATCH = 64
LN_EPS = 1e-5
MAX_TILE_B = 2048      # per-grid-step row cap; single step up to this many rows


def _round_up(n, m):
    return ((n + m - 1) // m) * m


def _auto_tile_b(batch):
    """Single grid step whenever the (8-aligned) batch fits the tile cap.

    Splitting the batch only pays off on v7x (2 TCs) once each step carries
    >= ~1k rows of work; on single-TC v5e/v6e it is pure per-step overhead.
    With MAX_TILE_B=2048 large batches naturally split into >=2 'parallel'
    steps for v7x while small batches (e.g. the default B=64) run as grid=(1,).
    """
    b8 = _round_up(max(batch, 1), 8)
    if b8 <= MAX_TILE_B:
        return b8
    return MAX_TILE_B


# ------------------------------- kernel --------------------------------------
def _mish_fast(x):
    # mish(x) = x * tanh(softplus(x));  tanh(softplus(x)) = n / (n + 2)
    # with n = e^x * (e^x + 2).  One EUP exp + one approx reciprocal, plus a
    # single Newton refinement (VPU-only, off the critical EUP slot) so the
    # result matches exact Mish to ~f32 precision.  Saturates to x for x > 20.
    u = jnp.exp(jnp.minimum(x, 20.0))
    n = u * (u + 2.0)
    d = n + 2.0
    r = pl.reciprocal(d, approx=True)
    r = r * (2.0 - d * r)          # Newton step: ~2^-24 relative error
    return jnp.where(x > 20.0, x, x * (n * r))


def mlp_resnet_kernel(
    x_ref,        # (TB, IN_DIM)                     f32 (cast to bf16 in-kernel)
    w_in_ref,     # (IN_DIM, HIDDEN)                 bf16
    b_in_ref,     # (1, HIDDEN)                      f32
    w1_ref,       # (NUM_BLOCKS, HIDDEN, 4*HIDDEN)   bf16 (LN affine folded in)
    b1_ref,       # (NUM_BLOCKS, 4*HIDDEN)           f32  (LN affine folded in)
    w2_ref,       # (NUM_BLOCKS, 4*HIDDEN, HIDDEN)   bf16
    b2_ref,       # (NUM_BLOCKS, HIDDEN)             f32
    w_out_ref,    # (HIDDEN, OUT_PAD)                bf16 (zero-padded past OUT_DIM)
    b_out_ref,    # (1, OUT_PAD)                     f32  (zero-padded past OUT_DIM)
    o_ref,        # (TB, OUT_PAD)                    bf16
):
    inv_h = 1.0 / HIDDEN

    # input projection: in_dim -> hidden (MXU, bf16 operands, f32 accumulate).
    # bf16 cast of x happens here (VPU), not as a separate XLA pass in HBM.
    h = (
        jnp.dot(x_ref[...].astype(jnp.bfloat16), w_in_ref[...],
                preferred_element_type=jnp.float32)
        + b_in_ref[...]
    )

    # residual blocks (num_blocks is small & static -> unrolled Python loop)
    for blk in range(NUM_BLOCKS):
        residual = h

        # TODO(synk): dropout(p=0.1) is a no-op at inference; training-mode
        # dropout (pltpu.prng_random_bits mask) intentionally not applied.

        # LayerNorm over feature dim -- fused one-pass statistics.
        s1 = jnp.sum(h, axis=-1, keepdims=True)
        s2 = jnp.sum(h * h, axis=-1, keepdims=True)
        mean = s1 * inv_h
        var = jnp.maximum(s2 * inv_h - mean * mean, 0.0)  # guard cancellation
        hn = (h - mean) * jax.lax.rsqrt(var + LN_EPS)
        # (LN affine ln_w/ln_b folded into w1/b1 by the wrapper.)

        # dense1: hidden -> 4*hidden, Mish, dense2: 4*hidden -> hidden
        z = (
            jnp.dot(hn.astype(jnp.bfloat16), w1_ref[blk],
                    preferred_element_type=jnp.float32)
            + b1_ref[blk]
        )
        z = _mish_fast(z)
        z = (
            jnp.dot(z.astype(jnp.bfloat16), w2_ref[blk],
                    preferred_element_type=jnp.float32)
            + b2_ref[blk]
        )

        h = residual + z

    # final activation + output projection into the lane-dense padded slab
    h = _mish_fast(h)
    o_ref[...] = (
        jnp.dot(h.astype(jnp.bfloat16), w_out_ref[...],
                preferred_element_type=jnp.float32)
        + b_out_ref[...]
    ).astype(o_ref.dtype)


# ------------------------------- wrapper --------------------------------------
@functools.partial(jax.jit, static_argnames=("tile_b",))
def mlp_resnet_forward(x, params, *, tile_b=None):
    B, _ = x.shape
    (w_in, b_in, ln_w, ln_b, w1, b1, w2, b2, w_out, b_out) = params

    if tile_b is None:
        tile_b = _auto_tile_b(B)
    B_pad = _round_up(B, tile_b)

    # Fold the LayerNorm affine into dense1 (exact algebraic identity since
    # the affine is applied immediately before the matmul).
    w1f = (ln_w[:, :, None] * w1).astype(jnp.bfloat16)        # (NB, H, 4H)
    b1f = jnp.einsum("bh,bhf->bf", ln_b, w1) + b1              # (NB, 4H) f32

    # Weight matrices -> bf16 MXU operands; biases stay f32.
    w_in_b = w_in.astype(jnp.bfloat16)
    w2_b = w2.astype(jnp.bfloat16)
    # Lane-dense output: pad the output projection to OUT_PAD columns.
    w_out_p = jnp.pad(w_out, ((0, 0), (0, OUT_PAD - OUT_DIM))).astype(jnp.bfloat16)
    b_out_p = jnp.pad(b_out, ((0, 0), (0, OUT_PAD - OUT_DIM)))

    # x is passed in its original dtype; only pad when the batch is not
    # already tile-aligned (never for the default B=64 -> no extra HBM pass).
    x_p = x if B_pad == B else jnp.pad(x, ((0, B_pad - B), (0, 0)))

    grid = (B_pad // tile_b,)

    def full(shape):
        # whole-array block, independent of the batch grid index
        nd = len(shape)
        return pl.BlockSpec(shape, lambda i, _nd=nd: (0,) * _nd)

    # Advisory cost estimate (matmul-dominant terms).
    flops = 2 * B_pad * (
        IN_DIM * HIDDEN
        + NUM_BLOCKS * (HIDDEN * 4 * HIDDEN + 4 * HIDDEN * HIDDEN)
        + HIDDEN * OUT_PAD
    )
    transcendentals = B_pad * 2 * (NUM_BLOCKS * 4 * HIDDEN + HIDDEN)  # exp + recip
    weight_bytes = 2 * (
        IN_DIM * HIDDEN
        + NUM_BLOCKS * (HIDDEN * 4 * HIDDEN + 4 * HIDDEN * HIDDEN)
        + HIDDEN * OUT_PAD
    ) + 4 * (HIDDEN + NUM_BLOCKS * (4 * HIDDEN + HIDDEN) + OUT_PAD)
    bytes_accessed = B_pad * IN_DIM * 4 + B_pad * OUT_PAD * 2 + weight_bytes

    out_pad = pl.pallas_call(
        mlp_resnet_kernel,
        out_shape=jax.ShapeDtypeStruct((B_pad, OUT_PAD), jnp.bfloat16),
        grid_spec=pltpu.PrefetchScalarGridSpec(
            num_scalar_prefetch=0,
            grid=grid,
            in_specs=[
                pl.BlockSpec((tile_b, IN_DIM), lambda i: (i, 0)),   # x
                full(w_in_b.shape),
                full(b_in.shape),
                full(w1f.shape),
                full(b1f.shape),
                full(w2_b.shape),
                full(b2.shape),
                full(w_out_p.shape),
                full(b_out_p.shape),
            ],
            out_specs=pl.BlockSpec((tile_b, OUT_PAD), lambda i: (i, 0)),
        ),
        compiler_params=pltpu.CompilerParams(
            dimension_semantics=("parallel",),   # shards batch steps on v7x
        ),
        cost_estimate=pl.CostEstimate(
            flops=int(flops),
            transcendentals=int(transcendentals),
            bytes_accessed=int(bytes_accessed),
        ),
    )(x_p, w_in_b, b_in, w1f, b1f, w2_b, b2, w_out_p, b_out_p)

    return out_pad[:B, :OUT_DIM].astype(jnp.float32)


# -------------------------- deterministic params ------------------------------
def init_params(key):
    """PyTorch nn.Linear-style init: U(-k, k), k = 1/sqrt(fan_in).
    LayerNorm: weight=1, bias=0.  Weights stored as (in, out)."""
    ks = list(jax.random.split(key, 8))

    def linear(k, fan_in, fan_out):
        kw, kb = jax.random.split(k)
        bound = 1.0 / jnp.sqrt(jnp.float32(fan_in))
        w = jax.random.uniform(kw, (fan_in, fan_out), jnp.float32, -bound, bound)
        b = jax.random.uniform(kb, (1, fan_out), jnp.float32, -bound, bound)
        return w, b

    w_in, b_in = linear(ks[0], IN_DIM, HIDDEN)
    w_out, b_out = linear(ks[1], HIDDEN, OUT_DIM)

    w1s, b1s, w2s, b2s = [], [], [], []
    for blk in range(NUM_BLOCKS):
        w1, b1 = linear(jax.random.fold_in(ks[2], blk), HIDDEN, 4 * HIDDEN)
        w2, b2 = linear(jax.random.fold_in(ks[3], blk), 4 * HIDDEN, HIDDEN)
        w1s.append(w1); b1s.append(b1[0]); w2s.append(w2); b2s.append(b2[0])

    w1 = jnp.stack(w1s)                       # (NB, H, 4H)
    b1 = jnp.stack(b1s)                       # (NB, 4H)
    w2 = jnp.stack(w2s)                       # (NB, 4H, H)
    b2 = jnp.stack(b2s)                       # (NB, H)
    ln_w = jnp.ones((NUM_BLOCKS, HIDDEN), jnp.float32)
    ln_b = jnp.zeros((NUM_BLOCKS, HIDDEN), jnp.float32)

    return (w_in, b_in, ln_w, ln_b, w1, b1, w2, b2, w_out, b_out)


# ----------------------------- pure-JAX reference -----------------------------
def reference_forward(x, params):
    """Same math as the kernel (incl. bf16 MXU operand casts with f32 accum);
    Mish via exact tanh(softplus).  Pure f32 PyTorch output differs from this
    only at the bf16-rounding level."""
    (w_in, b_in, ln_w, ln_b, w1, b1, w2, b2, w_out, b_out) = params
    bf = jnp.bfloat16

    def dot(a, w):
        return jnp.dot(a.astype(bf), w.astype(bf),
                       preferred_element_type=jnp.float32)

    def mish(v):
        sp = jnp.where(v > 20.0, v,
                       jnp.log1p(jnp.exp(jnp.minimum(v, 20.0))))
        return v * jnp.tanh(sp)

    h = dot(x, w_in) + b_in
    for blk in range(NUM_BLOCKS):
        residual = h
        mean = jnp.mean(h, axis=-1, keepdims=True)
        var = jnp.mean(h * h, axis=-1, keepdims=True) - mean * mean
        hn = (h - mean) * jax.lax.rsqrt(var + LN_EPS) * ln_w[blk] + ln_b[blk]
        z = mish(dot(hn, w1[blk]) + b1[blk])
        z = dot(z, w2[blk]) + b2[blk]
        h = residual + z
    h = mish(h)
    return dot(h, w_out) + b_out


# ----------------------------------- main --------------------------------------
if __name__ == "__main__":
    key = jax.random.PRNGKey(0)
    k_x, k_p = jax.random.split(key)
    x = jax.random.normal(k_x, (BATCH, IN_DIM), jnp.float32)
    params = init_params(k_p)

    out = mlp_resnet_forward(x, params)
    out = jax.block_until_ready(out)

    ref = reference_forward(x, params)
    assert out.shape == (BATCH, OUT_DIM)
    err = jnp.max(jnp.abs(out - ref))
    assert jnp.allclose(out, ref, atol=2e-2, rtol=2e-2), f"max abs err = {err}"
    print("KERNEL_OK")
</pallas_src>

<mosaic_0001>
module attributes {stable_mosaic.version = 11 : i64} {
  func.func @mlp_resnet_kernel(%arg0: i32, %arg1: memref<64x16xf32, #tpu.memory_space<vmem>>, %arg2: memref<16x32xbf16, #tpu.memory_space<vmem>>, %arg3: memref<1x32xf32, #tpu.memory_space<vmem>>, %arg4: memref<2x32x128xbf16, #tpu.memory_space<vmem>>, %arg5: memref<2x128xf32, #tpu.memory_space<vmem>>, %arg6: memref<2x128x32xbf16, #tpu.memory_space<vmem>>, %arg7: memref<2x32xf32, #tpu.memory_space<vmem>>, %arg8: memref<32x128xbf16, #tpu.memory_space<vmem>>, %arg9: memref<1x128xf32, #tpu.memory_space<vmem>>, %arg10: memref<64x128xbf16, #tpu.memory_space<vmem>>) attributes {dimension_semantics = [#tpu.dimension_semantics<parallel>], iteration_bounds = array<i64: 1>, scalar_prefetch = 0 : i64, scratch_operands = 0 : i64, tpu.core_type = #tpu.core_type<tc>, window_params = [{transform_indices = @transform_0, window_bounds = array<i64: 64, 16>}, {pipeline_mode = #tpu.pipeline_mode<synchronous>, transform_indices = @transform_1, window_bounds = array<i64: 16, 32>}, {pipeline_mode = #tpu.pipeline_mode<synchronous>, transform_indices = @transform_2, window_bounds = array<i64: 1, 32>}, {pipeline_mode = #tpu.pipeline_mode<synchronous>, transform_indices = @transform_3, window_bounds = array<i64: 2, 32, 128>}, {pipeline_mode = #tpu.pipeline_mode<synchronous>, transform_indices = @transform_4, window_bounds = array<i64: 2, 128>}, {pipeline_mode = #tpu.pipeline_mode<synchronous>, transform_indices = @transform_5, window_bounds = array<i64: 2, 128, 32>}, {pipeline_mode = #tpu.pipeline_mode<synchronous>, transform_indices = @transform_6, window_bounds = array<i64: 2, 32>}, {pipeline_mode = #tpu.pipeline_mode<synchronous>, transform_indices = @transform_7, window_bounds = array<i64: 32, 128>}, {pipeline_mode = #tpu.pipeline_mode<synchronous>, transform_indices = @transform_8, window_bounds = array<i64: 1, 128>}, {transform_indices = @transform_9, window_bounds = array<i64: 64, 128>}]} {
    %c0 = arith.constant 0 : index
    %c0_0 = arith.constant 0 : index
    %0 = vector.load %arg1[%c0, %c0_0] : memref<64x16xf32, #tpu.memory_space<vmem>>, vector<64x16xf32>
    %1 = arith.truncf %0 : vector<64x16xf32> to vector<64x16xbf16>
    %c0_1 = arith.constant 0 : index
    %c0_2 = arith.constant 0 : index
    %2 = vector.load %arg2[%c0_1, %c0_2] : memref<16x32xbf16, #tpu.memory_space<vmem>>, vector<16x32xbf16>
    %cst = arith.constant dense<0.000000e+00> : vector<64x32xf32>
    %3 = tpu.matmul %1, %2, %cst {dimension_numbers = #tpu.dot_dimension_numbers<[1], [0], [0], [1], [0, 0, 1, 1], [], []>} : vector<64x16xbf16>, vector<16x32xbf16>, vector<64x32xf32> -> vector<64x32xf32>
    %c0_3 = arith.constant 0 : index
    %c0_4 = arith.constant 0 : index
    %4 = vector.load %arg3[%c0_3, %c0_4] : memref<1x32xf32, #tpu.memory_space<vmem>>, vector<1x32xf32>
    %5 = vector.broadcast %4 : vector<1x32xf32> to vector<64x32xf32>
    %6 = arith.addf %3, %5 : vector<64x32xf32>
    %cst_5 = arith.constant dense<0.000000e+00> : vector<64xf32>
    %7 = vector.multi_reduction <add>, %6, %cst_5 [1] : vector<64x32xf32> to vector<64xf32>
    %8 = vector.shape_cast %7 : vector<64xf32> to vector<64x1xf32>
    %9 = arith.mulf %6, %6 : vector<64x32xf32>
    %cst_6 = arith.constant dense<0.000000e+00> : vector<64xf32>
    %10 = vector.multi_reduction <add>, %9, %cst_6 [1] : vector<64x32xf32> to vector<64xf32>
    %11 = vector.shape_cast %10 : vector<64xf32> to vector<64x1xf32>
    %cst_7 = arith.constant 3.125000e-02 : f32
    %12 = vector.broadcast %cst_7 : f32 to vector<64x1xf32>
    %13 = arith.mulf %8, %12 : vector<64x1xf32>
    %cst_8 = arith.constant 3.125000e-02 : f32
    %14 = vector.broadcast %cst_8 : f32 to vector<64x1xf32>
    %15 = arith.mulf %11, %14 : vector<64x1xf32>
    %16 = arith.mulf %13, %13 : vector<64x1xf32>
    %17 = arith.subf %15, %16 : vector<64x1xf32>
    %cst_9 = arith.constant 0.000000e+00 : f32
    %18 = vector.broadcast %cst_9 : f32 to vector<64x1xf32>
    %19 = arith.maximumf %17, %18 : vector<64x1xf32>
    %20 = vector.broadcast %13 : vector<64x1xf32> to vector<64x32xf32>
    %21 = arith.subf %6, %20 : vector<64x32xf32>
    %cst_10 = arith.constant 9.99999974E-6 : f32
    %22 = vector.broadcast %cst_10 : f32 to vector<64x1xf32>
    %23 = arith.addf %19, %22 : vector<64x1xf32>
    %24 = math.rsqrt %23 : vector<64x1xf32>
    %25 = vector.broadcast %24 : vector<64x1xf32> to vector<64x32xf32>
    %26 = arith.mulf %21, %25 : vector<64x32xf32>
    %27 = arith.truncf %26 : vector<64x32xf32> to vector<64x32xbf16>
    %c0_11 = arith.constant 0 : index
    %c0_12 = arith.constant 0 : index
    %c0_13 = arith.constant 0 : index
    %28 = vector.load %arg4[%c0_11, %c0_12, %c0_13] : memref<2x32x128xbf16, #tpu.memory_space<vmem>>, vector<1x32x128xbf16>
    %29 = vector.shape_cast %28 : vector<1x32x128xbf16> to vector<32x128xbf16>
    %cst_14 = arith.constant dense<0.000000e+00> : vector<64x128xf32>
    %30 = tpu.matmul %27, %29, %cst_14 {dimension_numbers = #tpu.dot_dimension_numbers<[1], [0], [0], [1], [0, 0, 1, 1], [], []>} : vector<64x32xbf16>, vector<32x128xbf16>, vector<64x128xf32> -> vector<64x128xf32>
    %c0_15 = arith.constant 0 : index
    %c0_16 = arith.constant 0 : index
    %31 = vector.load %arg5[%c0_15, %c0_16] : memref<2x128xf32, #tpu.memory_space<vmem>>, vector<1x128xf32>
    %32 = vector.shape_cast %31 : vector<1x128xf32> to vector<128xf32>
    %33 = vector.shape_cast %32 : vector<128xf32> to vector<1x128xf32>
    %34 = vector.broadcast %33 : vector<1x128xf32> to vector<64x128xf32>
    %35 = arith.addf %30, %34 : vector<64x128xf32>
    %cst_17 = arith.constant 2.000000e+01 : f32
    %36 = vector.broadcast %cst_17 : f32 to vector<64x128xf32>
    %37 = arith.minimumf %35, %36 : vector<64x128xf32>
    %38 = math.exp %37 : vector<64x128xf32>
    %cst_18 = arith.constant 2.000000e+00 : f32
    %39 = vector.broadcast %cst_18 : f32 to vector<64x128xf32>
    %40 = arith.addf %38, %39 : vector<64x128xf32>
    %41 = arith.mulf %38, %40 : vector<64x128xf32>
    %cst_19 = arith.constant 2.000000e+00 : f32
    %42 = vector.broadcast %cst_19 : f32 to vector<64x128xf32>
    %43 = arith.addf %41, %42 : vector<64x128xf32>
    %44 = tpu.reciprocal %43 {approx = true} : vector<64x128xf32> -> vector<64x128xf32>
    %45 = arith.mulf %43, %44 : vector<64x128xf32>
    %cst_20 = arith.constant 2.000000e+00 : f32
    %46 = vector.broadcast %cst_20 : f32 to vector<64x128xf32>
    %47 = arith.subf %46, %45 : vector<64x128xf32>
    %48 = arith.mulf %44, %47 : vector<64x128xf32>
    %cst_21 = arith.constant 2.000000e+01 : f32
    %49 = vector.broadcast %cst_21 : f32 to vector<64x128xf32>
    %50 = arith.cmpf ogt, %35, %49 : vector<64x128xf32>
    %51 = arith.mulf %41, %48 : vector<64x128xf32>
    %52 = arith.mulf %35, %51 : vector<64x128xf32>
    %53 = arith.select %50, %35, %52 : vector<64x128xi1>, vector<64x128xf32>
    %54 = arith.truncf %53 : vector<64x128xf32> to vector<64x128xbf16>
    %c0_22 = arith.constant 0 : index
    %c0_23 = arith.constant 0 : index
    %c0_24 = arith.constant 0 : index
    %55 = vector.load %arg6[%c0_22, %c0_23, %c0_24] : memref<2x128x32xbf16, #tpu.memory_space<vmem>>, vector<1x128x32xbf16>
    %56 = vector.shape_cast %55 : vector<1x128x32xbf16> to vector<128x32xbf16>
    %cst_25 = arith.constant dense<0.000000e+00> : vector<64x32xf32>
    %57 = tpu.matmul %54, %56, %cst_25 {dimension_numbers = #tpu.dot_dimension_numbers<[1], [0], [0], [1], [0, 0, 1, 1], [], []>} : vector<64x128xbf16>, vector<128x32xbf16>, vector<64x32xf32> -> vector<64x32xf32>
    %c0_26 = arith.constant 0 : index
    %c0_27 = arith.constant 0 : index
    %58 = vector.load %arg7[%c0_26, %c0_27] : memref<2x32xf32, #tpu.memory_space<vmem>>, vector<1x32xf32>
    %59 = vector.shape_cast %58 : vector<1x32xf32> to vector<32xf32>
    %60 = vector.shape_cast %59 : vector<32xf32> to vector<1x32xf32>
    %61 = vector.broadcast %60 : vector<1x32xf32> to vector<64x32xf32>
    %62 = arith.addf %57, %61 : vector<64x32xf32>
    %63 = arith.addf %6, %62 : vector<64x32xf32>
    %cst_28 = arith.constant dense<0.000000e+00> : vector<64xf32>
    %64 = vector.multi_reduction <add>, %63, %cst_28 [1] : vector<64x32xf32> to vector<64xf32>
    %65 = vector.shape_cast %64 : vector<64xf32> to vector<64x1xf32>
    %66 = arith.mulf %63, %63 : vector<64x32xf32>
    %cst_29 = arith.constant dense<0.000000e+00> : vector<64xf32>
    %67 = vector.multi_reduction <add>, %66, %cst_29 [1] : vector<64x32xf32> to vector<64xf32>
    %68 = vector.shape_cast %67 : vector<64xf32> to vector<64x1xf32>
    %cst_30 = arith.constant 3.125000e-02 : f32
    %69 = vector.broadcast %cst_30 : f32 to vector<64x1xf32>
    %70 = arith.mulf %65, %69 : vector<64x1xf32>
    %cst_31 = arith.constant 3.125000e-02 : f32
    %71 = vector.broadcast %cst_31 : f32 to vector<64x1xf32>
    %72 = arith.mulf %68, %71 : vector<64x1xf32>
    %73 = arith.mulf %70, %70 : vector<64x1xf32>
    %74 = arith.subf %72, %73 : vector<64x1xf32>
    %cst_32 = arith.constant 0.000000e+00 : f32
    %75 = vector.broadcast %cst_32 : f32 to vector<64x1xf32>
    %76 = arith.maximumf %74, %75 : vector<64x1xf32>
    %77 = vector.broadcast %70 : vector<64x1xf32> to vector<64x32xf32>
    %78 = arith.subf %63, %77 : vector<64x32xf32>
    %cst_33 = arith.constant 9.99999974E-6 : f32
    %79 = vector.broadcast %cst_33 : f32 to vector<64x1xf32>
    %80 = arith.addf %76, %79 : vector<64x1xf32>
    %81 = math.rsqrt %80 : vector<64x1xf32>
    %82 = vector.broadcast %81 : vector<64x1xf32> to vector<64x32xf32>
    %83 = arith.mulf %78, %82 : vector<64x32xf32>
    %84 = arith.truncf %83 : vector<64x32xf32> to vector<64x32xbf16>
    %c1 = arith.constant 1 : index
    %c0_34 = arith.constant 0 : index
    %c0_35 = arith.constant 0 : index
    %85 = vector.load %arg4[%c1, %c0_34, %c0_35] : memref<2x32x128xbf16, #tpu.memory_space<vmem>>, vector<1x32x128xbf16>
    %86 = vector.shape_cast %85 : vector<1x32x128xbf16> to vector<32x128xbf16>
    %cst_36 = arith.constant dense<0.000000e+00> : vector<64x128xf32>
    %87 = tpu.matmul %84, %86, %cst_36 {dimension_numbers = #tpu.dot_dimension_numbers<[1], [0], [0], [1], [0, 0, 1, 1], [], []>} : vector<64x32xbf16>, vector<32x128xbf16>, vector<64x128xf32> -> vector<64x128xf32>
    %c1_37 = arith.constant 1 : index
    %c0_38 = arith.constant 0 : index
    %88 = vector.load %arg5[%c1_37, %c0_38] : memref<2x128xf32, #tpu.memory_space<vmem>>, vector<1x128xf32>
    %89 = vector.shape_cast %88 : vector<1x128xf32> to vector<128xf32>
    %90 = vector.shape_cast %89 : vector<128xf32> to vector<1x128xf32>
    %91 = vector.broadcast %90 : vector<1x128xf32> to vector<64x128xf32>
    %92 = arith.addf %87, %91 : vector<64x128xf32>
    %cst_39 = arith.constant 2.000000e+01 : f32
    %93 = vector.broadcast %cst_39 : f32 to vector<64x128xf32>
    %94 = arith.minimumf %92, %93 : vector<64x128xf32>
    %95 = math.exp %94 : vector<64x128xf32>
    %cst_40 = arith.constant 2.000000e+00 : f32
    %96 = vector.broadcast %cst_40 : f32 to vector<64x128xf32>
    %97 = arith.addf %95, %96 : vector<64x128xf32>
    %98 = arith.mulf %95, %97 : vector<64x128xf32>
    %cst_41 = arith.constant 2.000000e+00 : f32
    %99 = vector.broadcast %cst_41 : f32 to vector<64x128xf32>
    %100 = arith.addf %98, %99 : vector<64x128xf32>
    %101 = tpu.reciprocal %100 {approx = true} : vector<64x128xf32> -> vector<64x128xf32>
    %102 = arith.mulf %100, %101 : vector<64x128xf32>
    %cst_42 = arith.constant 2.000000e+00 : f32
    %103 = vector.broadcast %cst_42 : f32 to vector<64x128xf32>
    %104 = arith.subf %103, %102 : vector<64x128xf32>
    %105 = arith.mulf %101, %104 : vector<64x128xf32>
    %cst_43 = arith.constant 2.000000e+01 : f32
    %106 = vector.broadcast %cst_43 : f32 to vector<64x128xf32>
    %107 = arith.cmpf ogt, %92, %106 : vector<64x128xf32>
    %108 = arith.mulf %98, %105 : vector<64x128xf32>
    %109 = arith.mulf %92, %108 : vector<64x128xf32>
    %110 = arith.select %107, %92, %109 : vector<64x128xi1>, vector<64x128xf32>
    %111 = arith.truncf %110 : vector<64x128xf32> to vector<64x128xbf16>
    %c1_44 = arith.constant 1 : index
    %c0_45 = arith.constant 0 : index
    %c0_46 = arith.constant 0 : index
    %112 = vector.load %arg6[%c1_44, %c0_45, %c0_46] : memref<2x128x32xbf16, #tpu.memory_space<vmem>>, vector<1x128x32xbf16>
    %113 = vector.shape_cast %112 : vector<1x128x32xbf16> to vector<128x32xbf16>
    %cst_47 = arith.constant dense<0.000000e+00> : vector<64x32xf32>
    %114 = tpu.matmul %111, %113, %cst_47 {dimension_numbers = #tpu.dot_dimension_numbers<[1], [0], [0], [1], [0, 0, 1, 1], [], []>} : vector<64x128xbf16>, vector<128x32xbf16>, vector<64x32xf32> -> vector<64x32xf32>
    %c1_48 = arith.constant 1 : index
    %c0_49 = arith.constant 0 : index
    %115 = vector.load %arg7[%c1_48, %c0_49] : memref<2x32xf32, #tpu.memory_space<vmem>>, vector<1x32xf32>
    %116 = vector.shape_cast %115 : vector<1x32xf32> to vector<32xf32>
    %117 = vector.shape_cast %116 : vector<32xf32> to vector<1x32xf32>
    %118 = vector.broadcast %117 : vector<1x32xf32> to vector<64x32xf32>
    %119 = arith.addf %114, %118 : vector<64x32xf32>
    %120 = arith.addf %63, %119 : vector<64x32xf32>
    %cst_50 = arith.constant 2.000000e+01 : f32
    %121 = vector.broadcast %cst_50 : f32 to vector<64x32xf32>
    %122 = arith.minimumf %120, %121 : vector<64x32xf32>
    %123 = math.exp %122 : vector<64x32xf32>
    %cst_51 = arith.constant 2.000000e+00 : f32
    %124 = vector.broadcast %cst_51 : f32 to vector<64x32xf32>
    %125 = arith.addf %123, %124 : vector<64x32xf32>
    %126 = arith.mulf %123, %125 : vector<64x32xf32>
    %cst_52 = arith.constant 2.000000e+00 : f32
    %127 = vector.broadcast %cst_52 : f32 to vector<64x32xf32>
    %128 = arith.addf %126, %127 : vector<64x32xf32>
    %129 = tpu.reciprocal %128 {approx = true} : vector<64x32xf32> -> vector<64x32xf32>
    %130 = arith.mulf %128, %129 : vector<64x32xf32>
    %cst_53 = arith.constant 2.000000e+00 : f32
    %131 = vector.broadcast %cst_53 : f32 to vector<64x32xf32>
    %132 = arith.subf %131, %130 : vector<64x32xf32>
    %133 = arith.mulf %129, %132 : vector<64x32xf32>
    %cst_54 = arith.constant 2.000000e+01 : f32
    %134 = vector.broadcast %cst_54 : f32 to vector<64x32xf32>
    %135 = arith.cmpf ogt, %120, %134 : vector<64x32xf32>
    %136 = arith.mulf %126, %133 : vector<64x32xf32>
    %137 = arith.mulf %120, %136 : vector<64x32xf32>
    %138 = arith.select %135, %120, %137 : vector<64x32xi1>, vector<64x32xf32>
    %139 = arith.truncf %138 : vector<64x32xf32> to vector<64x32xbf16>
    %c0_55 = arith.constant 0 : index
    %c0_56 = arith.constant 0 : index
    %140 = vector.load %arg8[%c0_55, %c0_56] : memref<32x128xbf16, #tpu.memory_space<vmem>>, vector<32x128xbf16>
    %cst_57 = arith.constant dense<0.000000e+00> : vector<64x128xf32>
    %141 = tpu.matmul %139, %140, %cst_57 {dimension_numbers = #tpu.dot_dimension_numbers<[1], [0], [0], [1], [0, 0, 1, 1], [], []>} : vector<64x32xbf16>, vector<32x128xbf16>, vector<64x128xf32> -> vector<64x128xf32>
    %c0_58 = arith.constant 0 : index
    %c0_59 = arith.constant 0 : index
    %142 = vector.load %arg9[%c0_58, %c0_59] : memref<1x128xf32, #tpu.memory_space<vmem>>, vector<1x128xf32>
    %143 = vector.broadcast %142 : vector<1x128xf32> to vector<64x128xf32>
    %144 = arith.addf %141, %143 : vector<64x128xf32>
    %145 = arith.truncf %144 : vector<64x128xf32> to vector<64x128xbf16>
    %c0_60 = arith.constant 0 : index
    %c0_61 = arith.constant 0 : index
    %146 = vector.load %arg10[%c0_60, %c0_61] : memref<64x128xbf16, #tpu.memory_space<vmem>>, vector<64x128xbf16>
    tpu.vector_store %arg10[%c0_60, %c0_61], %145 {strides = array<i32>} : memref<64x128xbf16, #tpu.memory_space<vmem>>, vector<64x128xbf16>,
    return
  }
  func.func @transform_0(%arg0: i32) -> (i32, i32) {
    %c0_i32 = arith.constant 0 : i32
    %c0_i32_0 = arith.constant 0 : i32
    return %arg0, %c0_i32 : i32, i32
  }
  func.func @transform_1(%arg0: i32) -> (i32, i32) {
    %c0_i32 = arith.constant 0 : i32
    %c0_i32_0 = arith.constant 0 : i32
    %c0_i32_1 = arith.constant 0 : i32
    return %c0_i32, %c0_i32_0 : i32, i32
  }
  func.func @transform_2(%arg0: i32) -> (i32, i32) {
    %c0_i32 = arith.constant 0 : i32
    %c0_i32_0 = arith.constant 0 : i32
    %c0_i32_1 = arith.constant 0 : i32
    return %c0_i32, %c0_i32_0 : i32, i32
  }
  func.func @transform_3(%arg0: i32) -> (i32, i32, i32) {
    %c0_i32 = arith.constant 0 : i32
    %c0_i32_0 = arith.constant 0 : i32
    %c0_i32_1 = arith.constant 0 : i32
    %c0_i32_2 = arith.constant 0 : i32
    return %c0_i32, %c0_i32_0, %c0_i32_1 : i32, i32, i32
  }
  func.func @transform_4(%arg0: i32) -> (i32, i32) {
    %c0_i32 = arith.constant 0 : i32
    %c0_i32_0 = arith.constant 0 : i32
    %c0_i32_1 = arith.constant 0 : i32
    return %c0_i32, %c0_i32_0 : i32, i32
  }
  func.func @transform_5(%arg0: i32) -> (i32, i32, i32) {
    %c0_i32 = arith.constant 0 : i32
    %c0_i32_0 = arith.constant 0 : i32
    %c0_i32_1 = arith.constant 0 : i32
    %c0_i32_2 = arith.constant 0 : i32
    return %c0_i32, %c0_i32_0, %c0_i32_1 : i32, i32, i32
  }
  func.func @transform_6(%arg0: i32) -> (i32, i32) {
    %c0_i32 = arith.constant 0 : i32
    %c0_i32_0 = arith.constant 0 : i32
    %c0_i32_1 = arith.constant 0 : i32
    return %c0_i32, %c0_i32_0 : i32, i32
  }
  func.func @transform_7(%arg0: i32) -> (i32, i32) {
    %c0_i32 = arith.constant 0 : i32
    %c0_i32_0 = arith.constant 0 : i32
    %c0_i32_1 = arith.constant 0 : i32
    return %c0_i32, %c0_i32_0 : i32, i32
  }
  func.func @transform_8(%arg0: i32) -> (i32, i32) {
    %c0_i32 = arith.constant 0 : i32
    %c0_i32_0 = arith.constant 0 : i32
    %c0_i32_1 = arith.constant 0 : i32
    return %c0_i32, %c0_i32_0 : i32, i32
  }
  func.func @transform_9(%arg0: i32) -> (i32, i32) {
    %c0_i32 = arith.constant 0 : i32
    %c0_i32_0 = arith.constant 0 : i32
    return %arg0, %c0_i32 : i32, i32
  }
}

</mosaic_0001>

<llo_original>
// kernel: mlp_resnet_forward.1
$region0: #{mlp_resnet_forward.1}
  #allocation0 [shape = 'u32[]', space=smem, size = 0x4, offset = 0x4, fixed_abs, tag = 'smem constant byte address 0x4 - core index']
  #allocation1 [shape = 'u32[144,128]{1,0:T(1,128)}', space=vmem, size = 0x12000, scoped, tag = 'internal scratch']
  %s0 = inlined_call_operand.vmem [shape: f32[64,16], index: 0, kind: input, shape index: {}]
  %s1 = inlined_call_operand.vmem [shape: bf16[16,32], index: 1, kind: input, shape index: {}]
  %s2 = inlined_call_operand.vmem [shape: f32[1,32], index: 2, kind: input, shape index: {}]
  %s3 = inlined_call_operand.vmem [shape: bf16[2,32,128], index: 3, kind: input, shape index: {}]
  %s4 = inlined_call_operand.vmem [shape: f32[2,128], index: 4, kind: input, shape index: {}]
  %s5 = inlined_call_operand.vmem [shape: bf16[2,128,32], index: 5, kind: input, shape index: {}]
  %s6 = inlined_call_operand.vmem [shape: f32[2,32], index: 6, kind: input, shape index: {}]
  %s7 = inlined_call_operand.vmem [shape: bf16[32,128], index: 7, kind: input, shape index: {}]
  %s8 = inlined_call_operand.vmem [shape: f32[1,128], index: 8, kind: input, shape index: {}]
  %s9 = inlined_call_operand.vmem [shape: bf16[64,128], index: 9, kind: output, shape index: {}]
  %s10 = sld [smem:[#allocation0]]
  $region46: #{mlp_resnet_forward.1} parent=0
    _
  %s12 = ssub.s32 1, %s10
  %s13 = scalar_select 0, %s12, %s10
  // Predicated region
  $region2: #{mlp_resnet_forward.1} parent=0 // pred_check
    _
  $region3: #{mlp_resnet_forward.1} parent=0 // pred_check_branch
    %15 = sbr.rel (0) target = $region5
  $region4: #{mlp_resnet_forward.1} parent=0 // pred_region
    _
  $region5: #{mlp_resnet_forward.1} parent=0 // pred_fallthru
    _
  // Predicated region
  $region6: #{mlp_resnet_forward.1} parent=0 // pred_check
    _
  $region7: #{mlp_resnet_forward.1} parent=0 // pred_check_branch
    %17 = sbr.rel (0) target = $region9
  $region8: #{mlp_resnet_forward.1} parent=0 // pred_region
    _
  $region9: #{mlp_resnet_forward.1} parent=0 // pred_fallthru
    _
  // Predicated region
  $region10: #{mlp_resnet_forward.1} parent=0 // pred_check
    _
  $region11: #{mlp_resnet_forward.1} parent=0 // pred_check_branch
    %19 = sbr.rel (0) target = $region13
  $region12: #{mlp_resnet_forward.1} parent=0 // pred_region
    _
  $region13: #{mlp_resnet_forward.1} parent=0 // pred_fallthru
    _
  // Predicated region
  $region14: #{mlp_resnet_forward.1} parent=0 // pred_check
    _
  $region15: #{mlp_resnet_forward.1} parent=0 // pred_check_branch
    %21 = sbr.rel (0) target = $region17
  $region16: #{mlp_resnet_forward.1} parent=0 // pred_region
    _
  $region17: #{mlp_resnet_forward.1} parent=0 // pred_fallthru
    _
  // Predicated region
  $region18: #{mlp_resnet_forward.1} parent=0 // pred_check
    _
  $region19: #{mlp_resnet_forward.1} parent=0 // pred_check_branch
    %23 = sbr.rel (0) target = $region21
  $region20: #{mlp_resnet_forward.1} parent=0 // pred_region
    _
  $region21: #{mlp_resnet_forward.1} parent=0 // pred_fallthru
    _
  // Predicated region
  $region22: #{mlp_resnet_forward.1} parent=0 // pred_check
    _
  $region23: #{mlp_resnet_forward.1} parent=0 // pred_check_branch
    %25 = sbr.rel (0) target = $region25
  $region24: #{mlp_resnet_forward.1} parent=0 // pred_region
    _
  $region25: #{mlp_resnet_forward.1} parent=0 // pred_fallthru
    _
  // Predicated region
  $region26: #{mlp_resnet_forward.1} parent=0 // pred_check
    _
  $region27: #{mlp_resnet_forward.1} parent=0 // pred_check_branch
    %27 = sbr.rel (0) target = $region29
  $region28: #{mlp_resnet_forward.1} parent=0 // pred_region
    _
  $region29: #{mlp_resnet_forward.1} parent=0 // pred_fallthru
    _
  // Predicated region
  $region30: #{mlp_resnet_forward.1} parent=0 // pred_check
    _
  $region31: #{mlp_resnet_forward.1} parent=0 // pred_check_branch
    %29 = sbr.rel (0) target = $region33
  $region32: #{mlp_resnet_forward.1} parent=0 // pred_region
    _
  $region33: #{mlp_resnet_forward.1} parent=0 // pred_fallthru
    _
  // Predicated region
  $region34: #{mlp_resnet_forward.1} parent=0 // pred_check
    _
  $region35: #{mlp_resnet_forward.1} parent=0 // pred_check_branch
    %31 = sbr.rel (0) target = $region37
  $region36: #{mlp_resnet_forward.1} parent=0 // pred_region
    _
  $region37: #{mlp_resnet_forward.1} parent=0 // pred_fallthru
    _
  %v33 = vld [vmem:[%s0] sm:$0xff]
  %v34 = vld [vmem:[%s0 + $0x8] sm:$0xff]
  %v35 = vld [vmem:[%s0 + $0x10] sm:$0xff]
  %v36 = vld [vmem:[%s0 + $0x18] sm:$0xff]
  %v37 = vld [vmem:[%s0 + $0x20] sm:$0xff]
  %v38 = vld [vmem:[%s0 + $0x28] sm:$0xff]
  %v39 = vld [vmem:[%s0 + $0x30] sm:$0xff]
  %v40 = vld [vmem:[%s0 + $0x38] sm:$0xff]
  %v41 = vpack.c.bf16 %v34, %v33
  %v42 = vpack.c.bf16 %v36, %v35
  %v43 = vpack.c.bf16 %v38, %v37
  %v44 = vpack.c.bf16 %v40, %v39
  %v45 = vld [vmem:[%s1] sm:$0xf]
  %v46 = vld [vmem:[%s1 + $0x4] sm:$0xf]
  %v47 = vld [vmem:[%s2] sm:$0x1]
  %v49 = vlaneseq
  %v50 = vshrl.u32 %v49, 7
  %v51 = vsub.s32 0, %v50
  %v52 = vrot.slane %v47, %v51
  %v56 = vunpack.c.l.b16 %v45
  %v57 = vunpack.c.l.b16 %v46
  %v58 = vpack.c.b16 %v57, %v56
  %vm60 = vcmask 130048
  %v62 = vsel %vm60, %v41, 0
  %v65 = vsel %vm60, %v42, 0
  %v68 = vsel %vm60, %v43, 0
  %v71 = vsel %vm60, %v44, 0
  %73 = vmatprep.subr.bf16.mxu0 0
  %74 = vmatpush1.bf16.msra.mxu0 %v58
  %75 = vmatprep.subr.bf16.mxu0 0
  %76 = vmatpush1.bf16.msra.mxu0 0
  %77 = vmatprep.subr.bf16.mxu0 0
  %78 = vmatpush1.bf16.msra.mxu0 0
  %79 = vmatprep.subr.bf16.mxu0 0
  %80 = vmatpush1.bf16.msra.mxu0 0
  %81 = vmatprep.subr.bf16.mxu0 0
  %82 = vmatpush1.bf16.msra.mxu0 0
  %83 = vmatprep.subr.bf16.mxu0 0
  %84 = vmatpush1.bf16.msra.mxu0 0
  %85 = vmatprep.subr.bf16.mxu0 0
  %86 = vmatpush1.bf16.msra.mxu0 0
  %87 = vmatprep.subr.bf16.mxu0 0
  %88 = vmatpush1.bf16.msra.mxu0 0
  %89 = vmatprep.subr.bf16.mxu0 0
  %90 = vmatpush1.bf16.msra.mxu0 0
  %91 = vmatprep.subr.bf16.mxu0 0
  %92 = vmatpush1.bf16.msra.mxu0 0
  %93 = vmatprep.subr.bf16.mxu0 0
  %94 = vmatpush1.bf16.msra.mxu0 0
  %95 = vmatprep.subr.bf16.mxu0 0
  %96 = vmatpush1.bf16.msra.mxu0 0
  %97 = vmatprep.subr.bf16.mxu0 0
  %98 = vmatpush1.bf16.msra.mxu0 0
  %99 = vmatprep.subr.bf16.mxu0 0
  %100 = vmatpush1.bf16.msra.mxu0 0
  %101 = vmatprep.subr.bf16.mxu0 0
  %102 = vmatpush1.bf16.msra.mxu0 0
  %103 = vmatprep.subr.bf16.mxu0 0
  %104 = vmatpush1.bf16.msra.mxu0 0
  %105 = vmatprep.mubr.bf16.mxu0 0
  %106 = vmatmul.mubr.bf16.gmra.mrb[0].mxu0 %v62
  %v107 = vpop.f32.mrb[0].mxu0
  %v108 = vadd.f32 %v52, %v107
  %v109 = vpop.f32.mrb[0].mxu0
  %v110 = vpop.f32.mrb[0].mxu0
  %v111 = vadd.f32 %v52, %v110
  %v112 = vpop.f32.mrb[0].mxu0
  %113 = vmatprep.mubr.bf16.mxu0 0
  %114 = vmatmul.mubr.bf16.gmra.mrb[0].mxu0 %v65
  %v115 = vpop.f32.mrb[0].mxu0
  %v116 = vadd.f32 %v52, %v115
  %v117 = vpop.f32.mrb[0].mxu0
  %v118 = vpop.f32.mrb[0].mxu0
  %v119 = vadd.f32 %v52, %v118
  %v120 = vpop.f32.mrb[0].mxu0
  %121 = vmatprep.mubr.bf16.mxu0 0
  %122 = vmatmul.mubr.bf16.gmra.mrb[0].mxu0 %v68
  %v123 = vpop.f32.mrb[0].mxu0
  %v124 = vadd.f32 %v52, %v123
  %v125 = vpop.f32.mrb[0].mxu0
  %v126 = vpop.f32.mrb[0].mxu0
  %v127 = vadd.f32 %v52, %v126
  %v128 = vpop.f32.mrb[0].mxu0
  %129 = vmatprep.mubr.bf16.mxu0 0
  %130 = vmatmul.mubr.bf16.gmra.mrb[0].mxu0 %v71
  %v131 = vpop.f32.mrb[0].mxu0
  %v132 = vadd.f32 %v52, %v131
  %v133 = vpop.f32.mrb[0].mxu0
  %v134 = vpop.f32.mrb[0].mxu0
  %v135 = vadd.f32 %v52, %v134
  %v136 = vpop.f32.mrb[0].mxu0
  %137 = vdwg.mxu0
  %vm138 = vcmask 261120
  %v139 = vsel %vm138, %v108, 0.0
  %140 = vadd.xlane.f32.xlu0 %v139
  %v141 = vpop.xlane.xlu0 %140
  %v142 = vsel %vm138, %v111, 0.0
  %143 = vadd.xlane.f32.xlu0 %v142
  %v144 = vpop.xlane.xlu0 %143
  %v145 = vsel %vm138, %v116, 0.0
  %146 = vadd.xlane.f32.xlu0 %v145
  %v147 = vpop.xlane.xlu0 %146
  %v148 = vsel %vm138, %v119, 0.0
  %149 = vadd.xlane.f32.xlu0 %v148
  %v150 = vpop.xlane.xlu0 %149
  %v151 = vsel %vm138, %v124, 0.0
  %152 = vadd.xlane.f32.xlu0 %v151
  %v153 = vpop.xlane.xlu0 %152
  %v154 = vsel %vm138, %v127, 0.0
  %155 = vadd.xlane.f32.xlu0 %v154
  %v156 = vpop.xlane.xlu0 %155
  %v157 = vsel %vm138, %v132, 0.0
  %158 = vadd.xlane.f32.xlu0 %v157
  %v159 = vpop.xlane.xlu0 %158
  %v160 = vsel %vm138, %v135, 0.0
  %161 = vadd.xlane.f32.xlu0 %v160
  %v162 = vpop.xlane.xlu0 %161
  %v163 = vmul.f32 %v108, %v108
  %v164 = vmul.f32 %v111, %v111
  %v165 = vmul.f32 %v116, %v116
  %v166 = vmul.f32 %v119, %v119
  %v167 = vmul.f32 %v124, %v124
  %v168 = vmul.f32 %v127, %v127
  %v169 = vmul.f32 %v132, %v132
  %v170 = vmul.f32 %v135, %v135
  %v171 = vsel %vm138, %v163, 0.0
  %172 = vadd.xlane.f32.xlu0 %v171
  %v173 = vpop.xlane.xlu0 %172
  %v174 = vsel %vm138, %v164, 0.0
  %175 = vadd.xlane.f32.xlu0 %v174
  %v176 = vpop.xlane.xlu0 %175
  %v177 = vsel %vm138, %v165, 0.0
  %178 = vadd.xlane.f32.xlu0 %v177
  %v179 = vpop.xlane.xlu0 %178
  %v180 = vsel %vm138, %v166, 0.0
  %181 = vadd.xlane.f32.xlu0 %v180
  %v182 = vpop.xlane.xlu0 %181
  %v183 = vsel %vm138, %v167, 0.0
  %184 = vadd.xlane.f32.xlu0 %v183
  %v185 = vpop.xlane.xlu0 %184
  %v186 = vsel %vm138, %v168, 0.0
  %187 = vadd.xlane.f32.xlu0 %v186
  %v188 = vpop.xlane.xlu0 %187
  %v189 = vsel %vm138, %v169, 0.0
  %190 = vadd.xlane.f32.xlu0 %v189
  %v191 = vpop.xlane.xlu0 %190
  %v192 = vsel %vm138, %v170, 0.0
  %193 = vadd.xlane.f32.xlu0 %v192
  %v194 = vpop.xlane.xlu0 %193
  %v195 = vmul.f32 %v141, 0.03125
  %v196 = vmul.f32 %v144, 0.03125
  %v197 = vmul.f32 %v147, 0.03125
  %v198 = vmul.f32 %v150, 0.03125
  %v199 = vmul.f32 %v153, 0.03125
  %v200 = vmul.f32 %v156, 0.03125
  %v201 = vmul.f32 %v159, 0.03125
  %v202 = vmul.f32 %v162, 0.03125
  %v203 = vmul.f32 %v173, 0.03125
  %v204 = vmul.f32 %v176, 0.03125
  %v205 = vmul.f32 %v179, 0.03125
  %v206 = vmul.f32 %v182, 0.03125
  %v207 = vmul.f32 %v185, 0.03125
  %v208 = vmul.f32 %v188, 0.03125
  %v209 = vmul.f32 %v191, 0.03125
  %v210 = vmul.f32 %v194, 0.03125
  %v211 = vmul.f32 %v195, %v195
  %v212 = vmul.f32 %v196, %v196
  %v213 = vmul.f32 %v197, %v197
  %v214 = vmul.f32 %v198, %v198
  %v215 = vmul.f32 %v199, %v199
  %v216 = vmul.f32 %v200, %v200
  %v217 = vmul.f32 %v201, %v201
  %v218 = vmul.f32 %v202, %v202
  %v219 = vsub.f32 %v203, %v211
  %v220 = vsub.f32 %v204, %v212
  %v221 = vsub.f32 %v205, %v213
  %v222 = vsub.f32 %v206, %v214
  %v223 = vsub.f32 %v207, %v215
  %v224 = vsub.f32 %v208, %v216
  %v225 = vsub.f32 %v209, %v217
  %v226 = vsub.f32 %v210, %v218
  %v227 = vmax.f32 %v219, 0.0
  %v228 = vmax.f32 %v220, 0.0
  %v229 = vmax.f32 %v221, 0.0
  %v230 = vmax.f32 %v222, 0.0
  %v231 = vmax.f32 %v223, 0.0
  %v232 = vmax.f32 %v224, 0.0
  %v233 = vmax.f32 %v225, 0.0
  %v234 = vmax.f32 %v226, 0.0
  %v235 = vsub.f32 %v108, %v195
  %v236 = vsub.f32 %v111, %v196
  %v237 = vsub.f32 %v116, %v197
  %v238 = vsub.f32 %v119, %v198
  %v239 = vsub.f32 %v124, %v199
  %v240 = vsub.f32 %v127, %v200
  %v241 = vsub.f32 %v132, %v201
  %v242 = vsub.f32 %v135, %v202
  %v243 = vadd.f32 %v227, 1e-05
  %v244 = vadd.f32 %v228, 1e-05
  %v245 = vadd.f32 %v229, 1e-05
  %v246 = vadd.f32 %v230, 1e-05
  %v247 = vadd.f32 %v231, 1e-05
  %v248 = vadd.f32 %v232, 1e-05
  %v249 = vadd.f32 %v233, 1e-05
  %v250 = vadd.f32 %v234, 1e-05
  %v251 = vrsqrt.pop %v243
  %v252 = vrsqrt.pop %v244
  %v253 = vrsqrt.pop %v245
  %v254 = vrsqrt.pop %v246
  %v255 = vrsqrt.pop %v247
  %v256 = vrsqrt.pop %v248
  %v257 = vrsqrt.pop %v249
  %v258 = vrsqrt.pop %v250
  %v259 = vmul.f32 %v235, %v251
  %v260 = vmul.f32 %v236, %v252
  %v261 = vmul.f32 %v237, %v253
  %v262 = vmul.f32 %v238, %v254
  %v263 = vmul.f32 %v239, %v255
  %v264 = vmul.f32 %v240, %v256
  %v265 = vmul.f32 %v241, %v257
  %v266 = vmul.f32 %v242, %v258
  %v267 = vpack.c.bf16 %v260, %v259
  %v268 = vpack.c.bf16 %v262, %v261
  %v269 = vpack.c.bf16 %v264, %v263
  %v270 = vpack.c.bf16 %v266, %v265
  %v271 = vld [vmem:[%s3] sm:$0xf]
  %v272 = vld [vmem:[%s3 + $0x4] sm:$0xf]
  %v273 = vld [vmem:[%s3 + $0x8] sm:$0xf]
  %v274 = vld [vmem:[%s3 + $0xc] sm:$0xf]
  %v275 = vld [vmem:[%s4] sm:$0x1]
  %v276 = vlaneseq
  %v277 = vshrl.u32 %v276, 7
  %v278 = vsub.s32 0, %v277
  %v279 = vrot.slane %v275, %v278
  %v284 = vunpack.c.l.b16 %v271
  %v285 = vunpack.c.l.b16 %v272
  %v286 = vunpack.c.l.b16 %v273
  %v287 = vunpack.c.l.b16 %v274
  %v288 = vpack.c.b16 %v285, %v284
  %v289 = vpack.c.b16 %v287, %v286
  %v293 = vsel %vm138, %v267, 0
  %v296 = vsel %vm138, %v268, 0
  %v299 = vsel %vm138, %v269, 0
  %v302 = vsel %vm138, %v270, 0
  %304 = vmatprep.subr.bf16.mxu0 0
  %305 = vmatpush1.bf16.msra.mxu0 %v288
  %306 = vmatprep.subr.bf16.mxu0 0
  %307 = vmatpush1.bf16.msra.mxu0 %v289
  %308 = vmatprep.subr.bf16.mxu0 0
  %309 = vmatpush1.bf16.msra.mxu0 0
  %310 = vmatprep.subr.bf16.mxu0 0
  %311 = vmatpush1.bf16.msra.mxu0 0
  %312 = vmatprep.subr.bf16.mxu0 0
  %313 = vmatpush1.bf16.msra.mxu0 0
  %314 = vmatprep.subr.bf16.mxu0 0
  %315 = vmatpush1.bf16.msra.mxu0 0
  %316 = vmatprep.subr.bf16.mxu0 0
  %317 = vmatpush1.bf16.msra.mxu0 0
  %318 = vmatprep.subr.bf16.mxu0 0
  %319 = vmatpush1.bf16.msra.mxu0 0
  %320 = vmatprep.subr.bf16.mxu0 0
  %321 = vmatpush1.bf16.msra.mxu0 0
  %322 = vmatprep.subr.bf16.mxu0 0
  %323 = vmatpush1.bf16.msra.mxu0 0
  %324 = vmatprep.subr.bf16.mxu0 0
  %325 = vmatpush1.bf16.msra.mxu0 0
  %326 = vmatprep.subr.bf16.mxu0 0
  %327 = vmatpush1.bf16.msra.mxu0 0
  %328 = vmatprep.subr.bf16.mxu0 0
  %329 = vmatpush1.bf16.msra.mxu0 0
  %330 = vmatprep.subr.bf16.mxu0 0
  %331 = vmatpush1.bf16.msra.mxu0 0
  %332 = vmatprep.subr.bf16.mxu0 0
  %333 = vmatpush1.bf16.msra.mxu0 0
  %334 = vmatprep.subr.bf16.mxu0 0
  %335 = vmatpush1.bf16.msra.mxu0 0
  %336 = vmatprep.mubr.bf16.mxu0 0
  %337 = vmatmul.mubr.bf16.gmra.mrb[0].mxu0 %v293
  %v338 = vpop.f32.mrb[0].mxu0
  %v339 = vadd.f32 %v279, %v338
  %v340 = vpop.f32.mrb[0].mxu0
  %v341 = vpop.f32.mrb[0].mxu0
  %v342 = vadd.f32 %v279, %v341
  %v343 = vpop.f32.mrb[0].mxu0
  %344 = vmatprep.mubr.bf16.mxu0 0
  %345 = vmatmul.mubr.bf16.gmra.mrb[0].mxu0 %v296
  %v346 = vpop.f32.mrb[0].mxu0
  %v347 = vadd.f32 %v279, %v346
  %v348 = vpop.f32.mrb[0].mxu0
  %v349 = vpop.f32.mrb[0].mxu0
  %v350 = vadd.f32 %v279, %v349
  %v351 = vpop.f32.mrb[0].mxu0
  %352 = vmatprep.mubr.bf16.mxu0 0
  %353 = vmatmul.mubr.bf16.gmra.mrb[0].mxu0 %v299
  %v354 = vpop.f32.mrb[0].mxu0
  %v355 = vadd.f32 %v279, %v354
  %v356 = vpop.f32.mrb[0].mxu0
  %v357 = vpop.f32.mrb[0].mxu0
  %v358 = vadd.f32 %v279, %v357
  %v359 = vpop.f32.mrb[0].mxu0
  %360 = vmatprep.mubr.bf16.mxu0 0
  %361 = vmatmul.mubr.bf16.gmra.mrb[0].mxu0 %v302
  %v362 = vpop.f32.mrb[0].mxu0
  %v363 = vadd.f32 %v279, %v362
  %v364 = vpop.f32.mrb[0].mxu0
  %v365 = vpop.f32.mrb[0].mxu0
  %v366 = vadd.f32 %v279, %v365
  %v367 = vpop.f32.mrb[0].mxu0
  %368 = vdwg.mxu0
  %v369 = vmin.f32 %v339, 20.0
  %v370 = vmin.f32 %v342, 20.0
  %v371 = vmin.f32 %v347, 20.0
  %v372 = vmin.f32 %v350, 20.0
  %v373 = vmin.f32 %v355, 20.0
  %v374 = vmin.f32 %v358, 20.0
  %v375 = vmin.f32 %v363, 20.0
  %v376 = vmin.f32 %v366, 20.0
  %v377 = vmul.f32 %v369, 1.442695
  %v378 = vpow.pop %v377
  %v379 = vmul.f32 %v370, 1.442695
  %v380 = vpow.pop %v379
  %v381 = vmul.f32 %v371, 1.442695
  %v382 = vpow.pop %v381
  %v383 = vmul.f32 %v372, 1.442695
  %v384 = vpow.pop %v383
  %v385 = vmul.f32 %v373, 1.442695
  %v386 = vpow.pop %v385
  %v387 = vmul.f32 %v374, 1.442695
  %v388 = vpow.pop %v387
  %v389 = vmul.f32 %v375, 1.442695
  %v390 = vpow.pop %v389
  %v391 = vmul.f32 %v376, 1.442695
  %v392 = vpow.pop %v391
  %v393 = vadd.f32 %v378, 2.0
  %v394 = vadd.f32 %v380, 2.0
  %v395 = vadd.f32 %v382, 2.0
  %v396 = vadd.f32 %v384, 2.0
  %v397 = vadd.f32 %v386, 2.0
  %v398 = vadd.f32 %v388, 2.0
  %v399 = vadd.f32 %v390, 2.0
  %v400 = vadd.f32 %v392, 2.0
  %v401 = vmul.f32 %v378, %v393
  %v402 = vmul.f32 %v380, %v394
  %v403 = vmul.f32 %v382, %v395
  %v404 = vmul.f32 %v384, %v396
  %v405 = vmul.f32 %v386, %v397
  %v406 = vmul.f32 %v388, %v398
  %v407 = vmul.f32 %v390, %v399
  %v408 = vmul.f32 %v392, %v400
  %v409 = vadd.f32 %v401, 2.0
  %v410 = vadd.f32 %v402, 2.0
  %v411 = vadd.f32 %v403, 2.0
  %v412 = vadd.f32 %v404, 2.0
  %v413 = vadd.f32 %v405, 2.0
  %v414 = vadd.f32 %v406, 2.0
  %v415 = vadd.f32 %v407, 2.0
  %v416 = vadd.f32 %v408, 2.0
  %v417 = vrcp.pop %v409
  %v418 = vrcp.pop %v410
  %v419 = vrcp.pop %v411
  %v420 = vrcp.pop %v412
  %v421 = vrcp.pop %v413
  %v422 = vrcp.pop %v414
  %v423 = vrcp.pop %v415
  %v424 = vrcp.pop %v416
  %v425 = vmul.f32 %v409, %v417
  %v426 = vmul.f32 %v410, %v418
  %v427 = vmul.f32 %v411, %v419
  %v428 = vmul.f32 %v412, %v420
  %v429 = vmul.f32 %v413, %v421
  %v430 = vmul.f32 %v414, %v422
  %v431 = vmul.f32 %v415, %v423
  %v432 = vmul.f32 %v416, %v424
  %v433 = vsub.f32 2.0, %v425
  %v434 = vsub.f32 2.0, %v426
  %v435 = vsub.f32 2.0, %v427
  %v436 = vsub.f32 2.0, %v428
  %v437 = vsub.f32 2.0, %v429
  %v438 = vsub.f32 2.0, %v430
  %v439 = vsub.f32 2.0, %v431
  %v440 = vsub.f32 2.0, %v432
  %v441 = vmul.f32 %v417, %v433
  %v442 = vmul.f32 %v418, %v434
  %v443 = vmul.f32 %v419, %v435
  %v444 = vmul.f32 %v420, %v436
  %v445 = vmul.f32 %v421, %v437
  %v446 = vmul.f32 %v422, %v438
  %v447 = vmul.f32 %v423, %v439
  %v448 = vmul.f32 %v424, %v440
  %vm449 = vcmp.gt.f32.partialorder %v339, 20.0
  %vm450 = vcmp.gt.f32.partialorder %v342, 20.0
  %vm451 = vcmp.gt.f32.partialorder %v347, 20.0
  %vm452 = vcmp.gt.f32.partialorder %v350, 20.0
  %vm453 = vcmp.gt.f32.partialorder %v355, 20.0
  %vm454 = vcmp.gt.f32.partialorder %v358, 20.0
  %vm455 = vcmp.gt.f32.partialorder %v363, 20.0
  %vm456 = vcmp.gt.f32.partialorder %v366, 20.0
  %v457 = vmul.f32 %v401, %v441
  %v458 = vmul.f32 %v402, %v442
  %v459 = vmul.f32 %v403, %v443
  %v460 = vmul.f32 %v404, %v444
  %v461 = vmul.f32 %v405, %v445
  %v462 = vmul.f32 %v406, %v446
  %v463 = vmul.f32 %v407, %v447
  %v464 = vmul.f32 %v408, %v448
  %v465 = vmul.f32 %v339, %v457
  %v466 = vmul.f32 %v342, %v458
  %v467 = vmul.f32 %v347, %v459
  %v468 = vmul.f32 %v350, %v460
  %v469 = vmul.f32 %v355, %v461
  %v470 = vmul.f32 %v358, %v462
  %v471 = vmul.f32 %v363, %v463
  %v472 = vmul.f32 %v366, %v464
  %v473 = vsel %vm449, %v339, %v465
  %v474 = vsel %vm450, %v342, %v466
  %v475 = vsel %vm451, %v347, %v467
  %v476 = vsel %vm452, %v350, %v468
  %v477 = vsel %vm453, %v355, %v469
  %v478 = vsel %vm454, %v358, %v470
  %v479 = vsel %vm455, %v363, %v471
  %v480 = vsel %vm456, %v366, %v472
  %v481 = vpack.c.bf16 %v474, %v473
  %v482 = vpack.c.bf16 %v476, %v475
  %v483 = vpack.c.bf16 %v478, %v477
  %v484 = vpack.c.bf16 %v480, %v479
  %v485 = vld [vmem:[%s5] sm:$0xf]
  %v486 = vld [vmem:[%s5 + $0x4] sm:$0xf]
  %v487 = vld [vmem:[%s5 + $0x8] sm:$0xf]
  %v488 = vld [vmem:[%s5 + $0xc] sm:$0xf]
  %v489 = vld [vmem:[%s5 + $0x10] sm:$0xf]
  %v490 = vld [vmem:[%s5 + $0x14] sm:$0xf]
  %v491 = vld [vmem:[%s5 + $0x18] sm:$0xf]
  %v492 = vld [vmem:[%s5 + $0x1c] sm:$0xf]
  %v493 = vld [vmem:[%s5 + $0x20] sm:$0xf]
  %v494 = vld [vmem:[%s5 + $0x24] sm:$0xf]
  %v495 = vld [vmem:[%s5 + $0x28] sm:$0xf]
  %v496 = vld [vmem:[%s5 + $0x2c] sm:$0xf]
  %v497 = vld [vmem:[%s5 + $0x30] sm:$0xf]
  %v498 = vld [vmem:[%s5 + $0x34] sm:$0xf]
  %v499 = vld [vmem:[%s5 + $0x38] sm:$0xf]
  %v500 = vld [vmem:[%s5 + $0x3c] sm:$0xf]
  %v501 = vld [vmem:[%s6] sm:$0x1]
  %v502 = vlaneseq
  %v503 = vshrl.u32 %v502, 7
  %v504 = vsub.s32 0, %v503
  %v505 = vrot.slane %v501, %v504
  %v522 = vunpack.c.l.b16 %v485
  %v523 = vunpack.c.l.b16 %v486
  %v524 = vunpack.c.l.b16 %v487
  %v525 = vunpack.c.l.b16 %v488
  %v526 = vunpack.c.l.b16 %v489
  %v527 = vunpack.c.l.b16 %v490
  %v528 = vunpack.c.l.b16 %v491
  %v529 = vunpack.c.l.b16 %v492
  %v530 = vunpack.c.l.b16 %v493
  %v531 = vunpack.c.l.b16 %v494
  %v532 = vunpack.c.l.b16 %v495
  %v533 = vunpack.c.l.b16 %v496
  %v534 = vunpack.c.l.b16 %v497
  %v535 = vunpack.c.l.b16 %v498
  %v536 = vunpack.c.l.b16 %v499
  %v537 = vunpack.c.l.b16 %v500
  %v538 = vpack.c.b16 %v523, %v522
  %v539 = vpack.c.b16 %v525, %v524
  %v540 = vpack.c.b16 %v527, %v526
  %v541 = vpack.c.b16 %v529, %v528
  %v542 = vpack.c.b16 %v531, %v530
  %v543 = vpack.c.b16 %v533, %v532
  %v544 = vpack.c.b16 %v535, %v534
  %v545 = vpack.c.b16 %v537, %v536
  %554 = vmatprep.subr.bf16.mxu0 0
  %555 = vmatpush1.bf16.msra.mxu0 %v538
  %556 = vmatprep.subr.bf16.mxu0 0
  %557 = vmatpush1.bf16.msra.mxu0 %v539
  %558 = vmatprep.subr.bf16.mxu0 0
  %559 = vmatpush1.bf16.msra.mxu0 %v540
  %560 = vmatprep.subr.bf16.mxu0 0
  %561 = vmatpush1.bf16.msra.mxu0 %v541
  %562 = vmatprep.subr.bf16.mxu0 0
  %563 = vmatpush1.bf16.msra.mxu0 %v542
  %564 = vmatprep.subr.bf16.mxu0 0
  %565 = vmatpush1.bf16.msra.mxu0 %v543
  %566 = vmatprep.subr.bf16.mxu0 0
  %567 = vmatpush1.bf16.msra.mxu0 %v544
  %568 = vmatprep.subr.bf16.mxu0 0
  %569 = vmatpush1.bf16.msra.mxu0 %v545
  %570 = vmatprep.subr.bf16.mxu0 0
  %571 = vmatpush1.bf16.msra.mxu0 0
  %572 = vmatprep.subr.bf16.mxu0 0
  %573 = vmatpush1.bf16.msra.mxu0 0
  %574 = vmatprep.subr.bf16.mxu0 0
  %575 = vmatpush1.bf16.msra.mxu0 0
  %576 = vmatprep.subr.bf16.mxu0 0
  %577 = vmatpush1.bf16.msra.mxu0 0
  %578 = vmatprep.subr.bf16.mxu0 0
  %579 = vmatpush1.bf16.msra.mxu0 0
  %580 = vmatprep.subr.bf16.mxu0 0
  %581 = vmatpush1.bf16.msra.mxu0 0
  %582 = vmatprep.subr.bf16.mxu0 0
  %583 = vmatpush1.bf16.msra.mxu0 0
  %584 = vmatprep.subr.bf16.mxu0 0
  %585 = vmatpush1.bf16.msra.mxu0 0
  %586 = vmatprep.mubr.bf16.mxu0 0
  %587 = vmatmul.mubr.bf16.gmra.mrb[0].mxu0 %v481
  %v588 = vpop.f32.mrb[0].mxu0
  %v589 = vadd.f32 %v505, %v588
  %v590 = vpop.f32.mrb[0].mxu0
  %v591 = vpop.f32.mrb[0].mxu0
  %v592 = vadd.f32 %v505, %v591
  %v593 = vpop.f32.mrb[0].mxu0
  %594 = vmatprep.mubr.bf16.mxu0 0
  %595 = vmatmul.mubr.bf16.gmra.mrb[0].mxu0 %v482
  %v596 = vpop.f32.mrb[0].mxu0
  %v597 = vadd.f32 %v505, %v596
  %v598 = vpop.f32.mrb[0].mxu0
  %v599 = vpop.f32.mrb[0].mxu0
  %v600 = vadd.f32 %v505, %v599
  %v601 = vpop.f32.mrb[0].mxu0
  %602 = vmatprep.mubr.bf16.mxu0 0
  %603 = vmatmul.mubr.bf16.gmra.mrb[0].mxu0 %v483
  %v604 = vpop.f32.mrb[0].mxu0
  %v605 = vadd.f32 %v505, %v604
  %v606 = vpop.f32.mrb[0].mxu0
  %v607 = vpop.f32.mrb[0].mxu0
  %v608 = vadd.f32 %v505, %v607
  %v609 = vpop.f32.mrb[0].mxu0
  %610 = vmatprep.mubr.bf16.mxu0 0
  %611 = vmatmul.mubr.bf16.gmra.mrb[0].mxu0 %v484
  %v612 = vpop.f32.mrb[0].mxu0
  %v613 = vadd.f32 %v505, %v612
  %v614 = vpop.f32.mrb[0].mxu0
  %v615 = vpop.f32.mrb[0].mxu0
  %v616 = vadd.f32 %v505, %v615
  %v617 = vpop.f32.mrb[0].mxu0
  %618 = vdwg.mxu0
  %v619 = vadd.f32 %v108, %v589
  %v620 = vadd.f32 %v111, %v592
  %v621 = vadd.f32 %v116, %v597
  %v622 = vadd.f32 %v119, %v600
  %v623 = vadd.f32 %v124, %v605
  %v624 = vadd.f32 %v127, %v608
  %v625 = vadd.f32 %v132, %v613
  %v626 = vadd.f32 %v135, %v616
  %v627 = vsel %vm138, %v619, 0.0
  %628 = vadd.xlane.f32.xlu0 %v627
  %v629 = vpop.xlane.xlu0 %628
  %v630 = vsel %vm138, %v620, 0.0
  %631 = vadd.xlane.f32.xlu0 %v630
  %v632 = vpop.xlane.xlu0 %631
  %v633 = vsel %vm138, %v621, 0.0
  %634 = vadd.xlane.f32.xlu0 %v633
  %v635 = vpop.xlane.xlu0 %634
  %v636 = vsel %vm138, %v622, 0.0
  %637 = vadd.xlane.f32.xlu0 %v636
  %v638 = vpop.xlane.xlu0 %637
  %v639 = vsel %vm138, %v623, 0.0
  %640 = vadd.xlane.f32.xlu0 %v639
  %v641 = vpop.xlane.xlu0 %640
  %v642 = vsel %vm138, %v624, 0.0
  %643 = vadd.xlane.f32.xlu0 %v642
  %v644 = vpop.xlane.xlu0 %643
  %v645 = vsel %vm138, %v625, 0.0
  %646 = vadd.xlane.f32.xlu0 %v645
  %v647 = vpop.xlane.xlu0 %646
  %v648 = vsel %vm138, %v626, 0.0
  %649 = vadd.xlane.f32.xlu0 %v648
  %v650 = vpop.xlane.xlu0 %649
  %v651 = vmul.f32 %v619, %v619
  %v652 = vmul.f32 %v620, %v620
  %v653 = vmul.f32 %v621, %v621
  %v654 = vmul.f32 %v622, %v622
  %v655 = vmul.f32 %v623, %v623
  %v656 = vmul.f32 %v624, %v624
  %v657 = vmul.f32 %v625, %v625
  %v658 = vmul.f32 %v626, %v626
  %v659 = vsel %vm138, %v651, 0.0
  %660 = vadd.xlane.f32.xlu0 %v659
  %v661 = vpop.xlane.xlu0 %660
  %v662 = vsel %vm138, %v652, 0.0
  %663 = vadd.xlane.f32.xlu0 %v662
  %v664 = vpop.xlane.xlu0 %663
  %v665 = vsel %vm138, %v653, 0.0
  %666 = vadd.xlane.f32.xlu0 %v665
  %v667 = vpop.xlane.xlu0 %666
  %v668 = vsel %vm138, %v654, 0.0
  %669 = vadd.xlane.f32.xlu0 %v668
  %v670 = vpop.xlane.xlu0 %669
  %v671 = vsel %vm138, %v655, 0.0
  %672 = vadd.xlane.f32.xlu0 %v671
  %v673 = vpop.xlane.xlu0 %672
  %v674 = vsel %vm138, %v656, 0.0
  %675 = vadd.xlane.f32.xlu0 %v674
  %v676 = vpop.xlane.xlu0 %675
  %v677 = vsel %vm138, %v657, 0.0
  %678 = vadd.xlane.f32.xlu0 %v677
  %v679 = vpop.xlane.xlu0 %678
  %v680 = vsel %vm138, %v658, 0.0
  %681 = vadd.xlane.f32.xlu0 %v680
  %v682 = vpop.xlane.xlu0 %681
  %v683 = vmul.f32 %v629, 0.03125
  %v684 = vmul.f32 %v632, 0.03125
  %v685 = vmul.f32 %v635, 0.03125
  %v686 = vmul.f32 %v638, 0.03125
  %v687 = vmul.f32 %v641, 0.03125
  %v688 = vmul.f32 %v644, 0.03125
  %v689 = vmul.f32 %v647, 0.03125
  %v690 = vmul.f32 %v650, 0.03125
  %v691 = vmul.f32 %v661, 0.03125
  %v692 = vmul.f32 %v664, 0.03125
  %v693 = vmul.f32 %v667, 0.03125
  %v694 = vmul.f32 %v670, 0.03125
  %v695 = vmul.f32 %v673, 0.03125
  %v696 = vmul.f32 %v676, 0.03125
  %v697 = vmul.f32 %v679, 0.03125
  %v698 = vmul.f32 %v682, 0.03125
  %v699 = vmul.f32 %v683, %v683
  %v700 = vmul.f32 %v684, %v684
  %v701 = vmul.f32 %v685, %v685
  %v702 = vmul.f32 %v686, %v686
  %v703 = vmul.f32 %v687, %v687
  %v704 = vmul.f32 %v688, %v688
  %v705 = vmul.f32 %v689, %v689
  %v706 = vmul.f32 %v690, %v690
  %v707 = vsub.f32 %v691, %v699
  %v708 = vsub.f32 %v692, %v700
  %v709 = vsub.f32 %v693, %v701
  %v710 = vsub.f32 %v694, %v702
  %v711 = vsub.f32 %v695, %v703
  %v712 = vsub.f32 %v696, %v704
  %v713 = vsub.f32 %v697, %v705
  %v714 = vsub.f32 %v698, %v706
  %v715 = vmax.f32 %v707, 0.0
  %v716 = vmax.f32 %v708, 0.0
  %v717 = vmax.f32 %v709, 0.0
  %v718 = vmax.f32 %v710, 0.0
  %v719 = vmax.f32 %v711, 0.0
  %v720 = vmax.f32 %v712, 0.0
  %v721 = vmax.f32 %v713, 0.0
  %v722 = vmax.f32 %v714, 0.0
  %v723 = vsub.f32 %v619, %v683
  %v724 = vsub.f32 %v620, %v684
  %v725 = vsub.f32 %v621, %v685
  %v726 = vsub.f32 %v622, %v686
  %v727 = vsub.f32 %v623, %v687
  %v728 = vsub.f32 %v624, %v688
  %v729 = vsub.f32 %v625, %v689
  %v730 = vsub.f32 %v626, %v690
  %v731 = vadd.f32 %v715, 1e-05
  %v732 = vadd.f32 %v716, 1e-05
  %v733 = vadd.f32 %v717, 1e-05
  %v734 = vadd.f32 %v718, 1e-05
  %v735 = vadd.f32 %v719, 1e-05
  %v736 = vadd.f32 %v720, 1e-05
  %v737 = vadd.f32 %v721, 1e-05
  %v738 = vadd.f32 %v722, 1e-05
  %v739 = vrsqrt.pop %v731
  %v740 = vrsqrt.pop %v732
  %v741 = vrsqrt.pop %v733
  %v742 = vrsqrt.pop %v734
  %v743 = vrsqrt.pop %v735
  %v744 = vrsqrt.pop %v736
  %v745 = vrsqrt.pop %v737
  %v746 = vrsqrt.pop %v738
  %v747 = vmul.f32 %v723, %v739
  %v748 = vmul.f32 %v724, %v740
  %v749 = vmul.f32 %v725, %v741
  %v750 = vmul.f32 %v726, %v742
  %v751 = vmul.f32 %v727, %v743
  %v752 = vmul.f32 %v728, %v744
  %v753 = vmul.f32 %v729, %v745
  %v754 = vmul.f32 %v730, %v746
  %v755 = vpack.c.bf16 %v748, %v747
  %v756 = vpack.c.bf16 %v750, %v749
  %v757 = vpack.c.bf16 %v752, %v751
  %v758 = vpack.c.bf16 %v754, %v753
  %s759 = scalar_lea.vmem %s3, 16
  %v760 = vld [vmem:[%s759] sm:$0xf]
  %v761 = vld [vmem:[%s759 + $0x4] sm:$0xf]
  %v762 = vld [vmem:[%s759 + $0x8] sm:$0xf]
  %v763 = vld [vmem:[%s759 + $0xc] sm:$0xf]
  %v764 = vld [vmem:[%s4 + $0x1] sm:$0x1]
  %v765 = vlaneseq
  %v766 = vshrl.u32 %v765, 7
  %v767 = vsub.s32 0, %v766
  %v768 = vrot.slane %v764, %v767
  %v773 = vunpack.c.l.b16 %v760
  %v774 = vunpack.c.l.b16 %v761
  %v775 = vunpack.c.l.b16 %v762
  %v776 = vunpack.c.l.b16 %v763
  %v777 = vpack.c.b16 %v774, %v773
  %v778 = vpack.c.b16 %v776, %v775
  %v782 = vsel %vm138, %v755, 0
  %v785 = vsel %vm138, %v756, 0
  %v788 = vsel %vm138, %v757, 0
  %v791 = vsel %vm138, %v758, 0
  %793 = vmatprep.subr.bf16.mxu0 0
  %794 = vmatpush1.bf16.msra.mxu0 %v777
  %795 = vmatprep.subr.bf16.mxu0 0
  %796 = vmatpush1.bf16.msra.mxu0 %v778
  %797 = vmatprep.subr.bf16.mxu0 0
  %798 = vmatpush1.bf16.msra.mxu0 0
  %799 = vmatprep.subr.bf16.mxu0 0
  %800 = vmatpush1.bf16.msra.mxu0 0
  %801 = vmatprep.subr.bf16.mxu0 0
  %802 = vmatpush1.bf16.msra.mxu0 0
  %803 = vmatprep.subr.bf16.mxu0 0
  %804 = vmatpush1.bf16.msra.mxu0 0
  %805 = vmatprep.subr.bf16.mxu0 0
  %806 = vmatpush1.bf16.msra.mxu0 0
  %807 = vmatprep.subr.bf16.mxu0 0
  %808 = vmatpush1.bf16.msra.mxu0 0
  %809 = vmatprep.subr.bf16.mxu0 0
  %810 = vmatpush1.bf16.msra.mxu0 0
  %811 = vmatprep.subr.bf16.mxu0 0
  %812 = vmatpush1.bf16.msra.mxu0 0
  %813 = vmatprep.subr.bf16.mxu0 0
  %814 = vmatpush1.bf16.msra.mxu0 0
  %815 = vmatprep.subr.bf16.mxu0 0
  %816 = vmatpush1.bf16.msra.mxu0 0
  %817 = vmatprep.subr.bf16.mxu0 0
  %818 = vmatpush1.bf16.msra.mxu0 0
  %819 = vmatprep.subr.bf16.mxu0 0
  %820 = vmatpush1.bf16.msra.mxu0 0
  %821 = vmatprep.subr.bf16.mxu0 0
  %822 = vmatpush1.bf16.msra.mxu0 0
  %823 = vmatprep.subr.bf16.mxu0 0
  %824 = vmatpush1.bf16.msra.mxu0 0
  %825 = vmatprep.mubr.bf16.mxu0 0
  %826 = vmatmul.mubr.bf16.gmra.mrb[0].mxu0 %v782
  %v827 = vpop.f32.mrb[0].mxu0
  %v828 = vadd.f32 %v768, %v827
  %v829 = vpop.f32.mrb[0].mxu0
  %v830 = vpop.f32.mrb[0].mxu0
  %v831 = vadd.f32 %v768, %v830
  %v832 = vpop.f32.mrb[0].mxu0
  %833 = vmatprep.mubr.bf16.mxu0 0
  %834 = vmatmul.mubr.bf16.gmra.mrb[0].mxu0 %v785
  %v835 = vpop.f32.mrb[0].mxu0
  %v836 = vadd.f32 %v768, %v835
  %v837 = vpop.f32.mrb[0].mxu0
  %v838 = vpop.f32.mrb[0].mxu0
  %v839 = vadd.f32 %v768, %v838
  %v840 = vpop.f32.mrb[0].mxu0
  %841 = vmatprep.mubr.bf16.mxu0 0
  %842 = vmatmul.mubr.bf16.gmra.mrb[0].mxu0 %v788
  %v843 = vpop.f32.mrb[0].mxu0
  %v844 = vadd.f32 %v768, %v843
  %v845 = vpop.f32.mrb[0].mxu0
  %v846 = vpop.f32.mrb[0].mxu0
  %v847 = vadd.f32 %v768, %v846
  %v848 = vpop.f32.mrb[0].mxu0
  %849 = vmatprep.mubr.bf16.mxu0 0
  %850 = vmatmul.mubr.bf16.gmra.mrb[0].mxu0 %v791
  %v851 = vpop.f32.mrb[0].mxu0
  %v852 = vadd.f32 %v768, %v851
  %v853 = vpop.f32.mrb[0].mxu0
  %v854 = vpop.f32.mrb[0].mxu0
  %v855 = vadd.f32 %v768, %v854
  %v856 = vpop.f32.mrb[0].mxu0
  %857 = vdwg.mxu0
  %v858 = vmin.f32 %v828, 20.0
  %v859 = vmin.f32 %v831, 20.0
  %v860 = vmin.f32 %v836, 20.0
  %v861 = vmin.f32 %v839, 20.0
  %v862 = vmin.f32 %v844, 20.0
  %v863 = vmin.f32 %v847, 20.0
  %v864 = vmin.f32 %v852, 20.0
  %v865 = vmin.f32 %v855, 20.0
  %v866 = vmul.f32 %v858, 1.442695
  %v867 = vpow.pop %v866
  %v868 = vmul.f32 %v859, 1.442695
  %v869 = vpow.pop %v868
  %v870 = vmul.f32 %v860, 1.442695
  %v871 = vpow.pop %v870
  %v872 = vmul.f32 %v861, 1.442695
  %v873 = vpow.pop %v872
  %v874 = vmul.f32 %v862, 1.442695
  %v875 = vpow.pop %v874
  %v876 = vmul.f32 %v863, 1.442695
  %v877 = vpow.pop %v876
  %v878 = vmul.f32 %v864, 1.442695
  %v879 = vpow.pop %v878
  %v880 = vmul.f32 %v865, 1.442695
  %v881 = vpow.pop %v880
  %v882 = vadd.f32 %v867, 2.0
  %v883 = vadd.f32 %v869, 2.0
  %v884 = vadd.f32 %v871, 2.0
  %v885 = vadd.f32 %v873, 2.0
  %v886 = vadd.f32 %v875, 2.0
  %v887 = vadd.f32 %v877, 2.0
  %v888 = vadd.f32 %v879, 2.0
  %v889 = vadd.f32 %v881, 2.0
  %v890 = vmul.f32 %v867, %v882
  %v891 = vmul.f32 %v869, %v883
  %v892 = vmul.f32 %v871, %v884
  %v893 = vmul.f32 %v873, %v885
  %v894 = vmul.f32 %v875, %v886
  %v895 = vmul.f32 %v877, %v887
  %v896 = vmul.f32 %v879, %v888
  %v897 = vmul.f32 %v881, %v889
  %v898 = vadd.f32 %v890, 2.0
  %v899 = vadd.f32 %v891, 2.0
  %v900 = vadd.f32 %v892, 2.0
  %v901 = vadd.f32 %v893, 2.0
  %v902 = vadd.f32 %v894, 2.0
  %v903 = vadd.f32 %v895, 2.0
  %v904 = vadd.f32 %v896, 2.0
  %v905 = vadd.f32 %v897, 2.0
  %v906 = vrcp.pop %v898
  %v907 = vrcp.pop %v899
  %v908 = vrcp.pop %v900
  %v909 = vrcp.pop %v901
  %v910 = vrcp.pop %v902
  %v911 = vrcp.pop %v903
  %v912 = vrcp.pop %v904
  %v913 = vrcp.pop %v905
  %v914 = vmul.f32 %v898, %v906
  %v915 = vmul.f32 %v899, %v907
  %v916 = vmul.f32 %v900, %v908
  %v917 = vmul.f32 %v901, %v909
  %v918 = vmul.f32 %v902, %v910
  %v919 = vmul.f32 %v903, %v911
  %v920 = vmul.f32 %v904, %v912
  %v921 = vmul.f32 %v905, %v913
  %v922 = vsub.f32 2.0, %v914
  %v923 = vsub.f32 2.0, %v915
  %v924 = vsub.f32 2.0, %v916
  %v925 = vsub.f32 2.0, %v917
  %v926 = vsub.f32 2.0, %v918
  %v927 = vsub.f32 2.0, %v919
  %v928 = vsub.f32 2.0, %v920
  %v929 = vsub.f32 2.0, %v921
  %v930 = vmul.f32 %v906, %v922
  %v931 = vmul.f32 %v907, %v923
  %v932 = vmul.f32 %v908, %v924
  %v933 = vmul.f32 %v909, %v925
  %v934 = vmul.f32 %v910, %v926
  %v935 = vmul.f32 %v911, %v927
  %v936 = vmul.f32 %v912, %v928
  %v937 = vmul.f32 %v913, %v929
  %vm938 = vcmp.gt.f32.partialorder %v828, 20.0
  %vm939 = vcmp.gt.f32.partialorder %v831, 20.0
  %vm940 = vcmp.gt.f32.partialorder %v836, 20.0
  %vm941 = vcmp.gt.f32.partialorder %v839, 20.0
  %vm942 = vcmp.gt.f32.partialorder %v844, 20.0
  %vm943 = vcmp.gt.f32.partialorder %v847, 20.0
  %vm944 = vcmp.gt.f32.partialorder %v852, 20.0
  %vm945 = vcmp.gt.f32.partialorder %v855, 20.0
  %v946 = vmul.f32 %v890, %v930
  %v947 = vmul.f32 %v891, %v931
  %v948 = vmul.f32 %v892, %v932
  %v949 = vmul.f32 %v893, %v933
  %v950 = vmul.f32 %v894, %v934
  %v951 = vmul.f32 %v895, %v935
  %v952 = vmul.f32 %v896, %v936
  %v953 = vmul.f32 %v897, %v937
  %v954 = vmul.f32 %v828, %v946
  %v955 = vmul.f32 %v831, %v947
  %v956 = vmul.f32 %v836, %v948
  %v957 = vmul.f32 %v839, %v949
  %v958 = vmul.f32 %v844, %v950
  %v959 = vmul.f32 %v847, %v951
  %v960 = vmul.f32 %v852, %v952
  %v961 = vmul.f32 %v855, %v953
  %v962 = vsel %vm938, %v828, %v954
  %v963 = vsel %vm939, %v831, %v955
  %v964 = vsel %vm940, %v836, %v956
  %v965 = vsel %vm941, %v839, %v957
  %v966 = vsel %vm942, %v844, %v958
  %v967 = vsel %vm943, %v847, %v959
  %v968 = vsel %vm944, %v852, %v960
  %v969 = vsel %vm945, %v855, %v961
  %v970 = vpack.c.bf16 %v963, %v962
  %v971 = vpack.c.bf16 %v965, %v964
  %v972 = vpack.c.bf16 %v967, %v966
  %v973 = vpack.c.bf16 %v969, %v968
  %s974 = scalar_lea.vmem %s5, 64
  %v975 = vld [vmem:[%s974] sm:$0xf]
  %v976 = vld [vmem:[%s974 + $0x4] sm:$0xf]
  %v977 = vld [vmem:[%s974 + $0x8] sm:$0xf]
  %v978 = vld [vmem:[%s974 + $0xc] sm:$0xf]
  %v979 = vld [vmem:[%s974 + $0x10] sm:$0xf]
  %v980 = vld [vmem:[%s974 + $0x14] sm:$0xf]
  %v981 = vld [vmem:[%s974 + $0x18] sm:$0xf]
  %v982 = vld [vmem:[%s974 + $0x1c] sm:$0xf]
  %v983 = vld [vmem:[%s974 + $0x20] sm:$0xf]
  %v984 = vld [vmem:[%s974 + $0x24] sm:$0xf]
  %v985 = vld [vmem:[%s974 + $0x28] sm:$0xf]
  %v986 = vld [vmem:[%s974 + $0x2c] sm:$0xf]
  %v987 = vld [vmem:[%s974 + $0x30] sm:$0xf]
  %v988 = vld [vmem:[%s974 + $0x34] sm:$0xf]
  %v989 = vld [vmem:[%s974 + $0x38] sm:$0xf]
  %v990 = vld [vmem:[%s974 + $0x3c] sm:$0xf]
  %v991 = vld [vmem:[%s6 + $0x1] sm:$0x1]
  %v992 = vlaneseq
  %v993 = vshrl.u32 %v992, 7
  %v994 = vsub.s32 0, %v993
  %v995 = vrot.slane %v991, %v994
  %v1012 = vunpack.c.l.b16 %v975
  %v1013 = vunpack.c.l.b16 %v976
  %v1014 = vunpack.c.l.b16 %v977
  %v1015 = vunpack.c.l.b16 %v978
  %v1016 = vunpack.c.l.b16 %v979
  %v1017 = vunpack.c.l.b16 %v980
  %v1018 = vunpack.c.l.b16 %v981
  %v1019 = vunpack.c.l.b16 %v982
  %v1020 = vunpack.c.l.b16 %v983
  %v1021 = vunpack.c.l.b16 %v984
  %v1022 = vunpack.c.l.b16 %v985
  %v1023 = vunpack.c.l.b16 %v986
  %v1024 = vunpack.c.l.b16 %v987
  %v1025 = vunpack.c.l.b16 %v988
  %v1026 = vunpack.c.l.b16 %v989
  %v1027 = vunpack.c.l.b16 %v990
  %v1028 = vpack.c.b16 %v1013, %v1012
  %v1029 = vpack.c.b16 %v1015, %v1014
  %v1030 = vpack.c.b16 %v1017, %v1016
  %v1031 = vpack.c.b16 %v1019, %v1018
  %v1032 = vpack.c.b16 %v1021, %v1020
  %v1033 = vpack.c.b16 %v1023, %v1022
  %v1034 = vpack.c.b16 %v1025, %v1024
  %v1035 = vpack.c.b16 %v1027, %v1026
  %1044 = vmatprep.subr.bf16.mxu0 0
  %1045 = vmatpush1.bf16.msra.mxu0 %v1028
  %1046 = vmatprep.subr.bf16.mxu0 0
  %1047 = vmatpush1.bf16.msra.mxu0 %v1029
  %1048 = vmatprep.subr.bf16.mxu0 0
  %1049 = vmatpush1.bf16.msra.mxu0 %v1030
  %1050 = vmatprep.subr.bf16.mxu0 0
  %1051 = vmatpush1.bf16.msra.mxu0 %v1031
  %1052 = vmatprep.subr.bf16.mxu0 0
  %1053 = vmatpush1.bf16.msra.mxu0 %v1032
  %1054 = vmatprep.subr.bf16.mxu0 0
  %1055 = vmatpush1.bf16.msra.mxu0 %v1033
  %1056 = vmatprep.subr.bf16.mxu0 0
  %1057 = vmatpush1.bf16.msra.mxu0 %v1034
  %1058 = vmatprep.subr.bf16.mxu0 0
  %1059 = vmatpush1.bf16.msra.mxu0 %v1035
  %1060 = vmatprep.subr.bf16.mxu0 0
  %1061 = vmatpush1.bf16.msra.mxu0 0
  %1062 = vmatprep.subr.bf16.mxu0 0
  %1063 = vmatpush1.bf16.msra.mxu0 0
  %1064 = vmatprep.subr.bf16.mxu0 0
  %1065 = vmatpush1.bf16.msra.mxu0 0
  %1066 = vmatprep.subr.bf16.mxu0 0
  %1067 = vmatpush1.bf16.msra.mxu0 0
  %1068 = vmatprep.subr.bf16.mxu0 0
  %1069 = vmatpush1.bf16.msra.mxu0 0
  %1070 = vmatprep.subr.bf16.mxu0 0
  %1071 = vmatpush1.bf16.msra.mxu0 0
  %1072 = vmatprep.subr.bf16.mxu0 0
  %1073 = vmatpush1.bf16.msra.mxu0 0
  %1074 = vmatprep.subr.bf16.mxu0 0
  %1075 = vmatpush1.bf16.msra.mxu0 0
  %1076 = vmatprep.mubr.bf16.mxu0 0
  %1077 = vmatmul.mubr.bf16.gmra.mrb[0].mxu0 %v970
  %v1078 = vpop.f32.mrb[0].mxu0
  %v1079 = vadd.f32 %v995, %v1078
  %v1080 = vpop.f32.mrb[0].mxu0
  %v1081 = vpop.f32.mrb[0].mxu0
  %v1082 = vadd.f32 %v995, %v1081
  %v1083 = vpop.f32.mrb[0].mxu0
  %1084 = vmatprep.mubr.bf16.mxu0 0
  %1085 = vmatmul.mubr.bf16.gmra.mrb[0].mxu0 %v971
  %v1086 = vpop.f32.mrb[0].mxu0
  %v1087 = vadd.f32 %v995, %v1086
  %v1088 = vpop.f32.mrb[0].mxu0
  %v1089 = vpop.f32.mrb[0].mxu0
  %v1090 = vadd.f32 %v995, %v1089
  %v1091 = vpop.f32.mrb[0].mxu0
  %1092 = vmatprep.mubr.bf16.mxu0 0
  %1093 = vmatmul.mubr.bf16.gmra.mrb[0].mxu0 %v972
  %v1094 = vpop.f32.mrb[0].mxu0
  %v1095 = vadd.f32 %v995, %v1094
  %v1096 = vpop.f32.mrb[0].mxu0
  %v1097 = vpop.f32.mrb[0].mxu0
  %v1098 = vadd.f32 %v995, %v1097
  %v1099 = vpop.f32.mrb[0].mxu0
  %1100 = vmatprep.mubr.bf16.mxu0 0
  %1101 = vmatmul.mubr.bf16.gmra.mrb[0].mxu0 %v973
  %v1102 = vpop.f32.mrb[0].mxu0
  %v1103 = vadd.f32 %v995, %v1102
  %v1104 = vpop.f32.mrb[0].mxu0
  %v1105 = vpop.f32.mrb[0].mxu0
  %v1106 = vadd.f32 %v995, %v1105
  %v1107 = vpop.f32.mrb[0].mxu0
  %1108 = vdwg.mxu0
  %v1109 = vadd.f32 %v619, %v1079
  %v1110 = vadd.f32 %v620, %v1082
  %v1111 = vadd.f32 %v621, %v1087
  %v1112 = vadd.f32 %v622, %v1090
  %v1113 = vadd.f32 %v623, %v1095
  %v1114 = vadd.f32 %v624, %v1098
  %v1115 = vadd.f32 %v625, %v1103
  %v1116 = vadd.f32 %v626, %v1106
  %v1117 = vmin.f32 %v1109, 20.0
  %v1118 = vmin.f32 %v1110, 20.0
  %v1119 = vmin.f32 %v1111, 20.0
  %v1120 = vmin.f32 %v1112, 20.0
  %v1121 = vmin.f32 %v1113, 20.0
  %v1122 = vmin.f32 %v1114, 20.0
  %v1123 = vmin.f32 %v1115, 20.0
  %v1124 = vmin.f32 %v1116, 20.0
  %v1125 = vmul.f32 %v1117, 1.442695
  %v1126 = vpow.pop %v1125
  %v1127 = vmul.f32 %v1118, 1.442695
  %v1128 = vpow.pop %v1127
  %v1129 = vmul.f32 %v1119, 1.442695
  %v1130 = vpow.pop %v1129
  %v1131 = vmul.f32 %v1120, 1.442695
  %v1132 = vpow.pop %v1131
  %v1133 = vmul.f32 %v1121, 1.442695
  %v1134 = vpow.pop %v1133
  %v1135 = vmul.f32 %v1122, 1.442695
  %v1136 = vpow.pop %v1135
  %v1137 = vmul.f32 %v1123, 1.442695
  %v1138 = vpow.pop %v1137
  %v1139 = vmul.f32 %v1124, 1.442695
  %v1140 = vpow.pop %v1139
  %v1141 = vadd.f32 %v1126, 2.0
  %v1142 = vadd.f32 %v1128, 2.0
  %v1143 = vadd.f32 %v1130, 2.0
  %v1144 = vadd.f32 %v1132, 2.0
  %v1145 = vadd.f32 %v1134, 2.0
  %v1146 = vadd.f32 %v1136, 2.0
  %v1147 = vadd.f32 %v1138, 2.0
  %v1148 = vadd.f32 %v1140, 2.0
  %v1149 = vmul.f32 %v1126, %v1141
  %v1150 = vmul.f32 %v1128, %v1142
  %v1151 = vmul.f32 %v1130, %v1143
  %v1152 = vmul.f32 %v1132, %v1144
  %v1153 = vmul.f32 %v1134, %v1145
  %v1154 = vmul.f32 %v1136, %v1146
  %v1155 = vmul.f32 %v1138, %v1147
  %v1156 = vmul.f32 %v1140, %v1148
  %v1157 = vadd.f32 %v1149, 2.0
  %v1158 = vadd.f32 %v1150, 2.0
  %v1159 = vadd.f32 %v1151, 2.0
  %v1160 = vadd.f32 %v1152, 2.0
  %v1161 = vadd.f32 %v1153, 2.0
  %v1162 = vadd.f32 %v1154, 2.0
  %v1163 = vadd.f32 %v1155, 2.0
  %v1164 = vadd.f32 %v1156, 2.0
  %v1165 = vrcp.pop %v1157
  %v1166 = vrcp.pop %v1158
  %v1167 = vrcp.pop %v1159
  %v1168 = vrcp.pop %v1160
  %v1169 = vrcp.pop %v1161
  %v1170 = vrcp.pop %v1162
  %v1171 = vrcp.pop %v1163
  %v1172 = vrcp.pop %v1164
  %v1173 = vmul.f32 %v1157, %v1165
  %v1174 = vmul.f32 %v1158, %v1166
  %v1175 = vmul.f32 %v1159, %v1167
  %v1176 = vmul.f32 %v1160, %v1168
  %v1177 = vmul.f32 %v1161, %v1169
  %v1178 = vmul.f32 %v1162, %v1170
  %v1179 = vmul.f32 %v1163, %v1171
  %v1180 = vmul.f32 %v1164, %v1172
  %v1181 = vsub.f32 2.0, %v1173
  %v1182 = vsub.f32 2.0, %v1174
  %v1183 = vsub.f32 2.0, %v1175
  %v1184 = vsub.f32 2.0, %v1176
  %v1185 = vsub.f32 2.0, %v1177
  %v1186 = vsub.f32 2.0, %v1178
  %v1187 = vsub.f32 2.0, %v1179
  %v1188 = vsub.f32 2.0, %v1180
  %v1189 = vmul.f32 %v1165, %v1181
  %v1190 = vmul.f32 %v1166, %v1182
  %v1191 = vmul.f32 %v1167, %v1183
  %v1192 = vmul.f32 %v1168, %v1184
  %v1193 = vmul.f32 %v1169, %v1185
  %v1194 = vmul.f32 %v1170, %v1186
  %v1195 = vmul.f32 %v1171, %v1187
  %v1196 = vmul.f32 %v1172, %v1188
  %vm1197 = vcmp.gt.f32.partialorder %v1109, 20.0
  %vm1198 = vcmp.gt.f32.partialorder %v1110, 20.0
  %vm1199 = vcmp.gt.f32.partialorder %v1111, 20.0
  %vm1200 = vcmp.gt.f32.partialorder %v1112, 20.0
  %vm1201 = vcmp.gt.f32.partialorder %v1113, 20.0
  %vm1202 = vcmp.gt.f32.partialorder %v1114, 20.0
  %vm1203 = vcmp.gt.f32.partialorder %v1115, 20.0
  %vm1204 = vcmp.gt.f32.partialorder %v1116, 20.0
  %v1205 = vmul.f32 %v1149, %v1189
  %v1206 = vmul.f32 %v1150, %v1190
  %v1207 = vmul.f32 %v1151, %v1191
  %v1208 = vmul.f32 %v1152, %v1192
  %v1209 = vmul.f32 %v1153, %v1193
  %v1210 = vmul.f32 %v1154, %v1194
  %v1211 = vmul.f32 %v1155, %v1195
  %v1212 = vmul.f32 %v1156, %v1196
  %v1213 = vmul.f32 %v1109, %v1205
  %v1214 = vmul.f32 %v1110, %v1206
  %v1215 = vmul.f32 %v1111, %v1207
  %v1216 = vmul.f32 %v1112, %v1208
  %v1217 = vmul.f32 %v1113, %v1209
  %v1218 = vmul.f32 %v1114, %v1210
  %v1219 = vmul.f32 %v1115, %v1211
  %v1220 = vmul.f32 %v1116, %v1212
  %v1221 = vsel %vm1197, %v1109, %v1213
  %v1222 = vsel %vm1198, %v1110, %v1214
  %v1223 = vsel %vm1199, %v1111, %v1215
  %v1224 = vsel %vm1200, %v1112, %v1216
  %v1225 = vsel %vm1201, %v1113, %v1217
  %v1226 = vsel %vm1202, %v1114, %v1218
  %v1227 = vsel %vm1203, %v1115, %v1219
  %v1228 = vsel %vm1204, %v1116, %v1220
  %v1229 = vpack.c.bf16 %v1222, %v1221
  %v1230 = vpack.c.bf16 %v1224, %v1223
  %v1231 = vpack.c.bf16 %v1226, %v1225
  %v1232 = vpack.c.bf16 %v1228, %v1227
  %v1233 = vld [vmem:[%s7] sm:$0xf]
  %v1234 = vld [vmem:[%s7 + $0x4] sm:$0xf]
  %v1235 = vld [vmem:[%s7 + $0x8] sm:$0xf]
  %v1236 = vld [vmem:[%s7 + $0xc] sm:$0xf]
  %v1237 = vld [vmem:[%s8] sm:$0x1]
  %v1239 = vlaneseq
  %v1240 = vshrl.u32 %v1239, 7
  %v1241 = vsub.s32 0, %v1240
  %v1242 = vrot.slane %v1237, %v1241
  %v1248 = vunpack.c.l.b16 %v1233
  %v1249 = vunpack.c.l.b16 %v1234
  %v1250 = vunpack.c.l.b16 %v1235
  %v1251 = vunpack.c.l.b16 %v1236
  %v1252 = vpack.c.b16 %v1249, %v1248
  %v1253 = vpack.c.b16 %v1251, %v1250
  %v1257 = vsel %vm138, %v1229, 0
  %v1260 = vsel %vm138, %v1230, 0
  %v1263 = vsel %vm138, %v1231, 0
  %v1266 = vsel %vm138, %v1232, 0
  %1268 = vmatprep.subr.bf16.mxu0 0
  %1269 = vmatpush1.bf16.msra.mxu0 %v1252
  %1270 = vmatprep.subr.bf16.mxu0 0
  %1271 = vmatpush1.bf16.msra.mxu0 %v1253
  %1272 = vmatprep.subr.bf16.mxu0 0
  %1273 = vmatpush1.bf16.msra.mxu0 0
  %1274 = vmatprep.subr.bf16.mxu0 0
  %1275 = vmatpush1.bf16.msra.mxu0 0
  %1276 = vmatprep.subr.bf16.mxu0 0
  %1277 = vmatpush1.bf16.msra.mxu0 0
  %1278 = vmatprep.subr.bf16.mxu0 0
  %1279 = vmatpush1.bf16.msra.mxu0 0
  %1280 = vmatprep.subr.bf16.mxu0 0
  %1281 = vmatpush1.bf16.msra.mxu0 0
  %1282 = vmatprep.subr.bf16.mxu0 0
  %1283 = vmatpush1.bf16.msra.mxu0 0
  %1284 = vmatprep.subr.bf16.mxu0 0
  %1285 = vmatpush1.bf16.msra.mxu0 0
  %1286 = vmatprep.subr.bf16.mxu0 0
  %1287 = vmatpush1.bf16.msra.mxu0 0
  %1288 = vmatprep.subr.bf16.mxu0 0
  %1289 = vmatpush1.bf16.msra.mxu0 0
  %1290 = vmatprep.subr.bf16.mxu0 0
  %1291 = vmatpush1.bf16.msra.mxu0 0
  %1292 = vmatprep.subr.bf16.mxu0 0
  %1293 = vmatpush1.bf16.msra.mxu0 0
  %1294 = vmatprep.subr.bf16.mxu0 0
  %1295 = vmatpush1.bf16.msra.mxu0 0
  %1296 = vmatprep.subr.bf16.mxu0 0
  %1297 = vmatpush1.bf16.msra.mxu0 0
  %1298 = vmatprep.subr.bf16.mxu0 0
  %1299 = vmatpush1.bf16.msra.mxu0 0
  %1300 = vmatprep.mubr.bf16.mxu0 0
  %1301 = vmatmul.mubr.bf16.gmra.mrb[0].mxu0 %v1257
  %v1302 = vpop.f32.mrb[0].mxu0
  %v1303 = vadd.f32 %v1242, %v1302
  %v1304 = vpop.f32.mrb[0].mxu0
  %v1305 = vpop.f32.mrb[0].mxu0
  %v1306 = vadd.f32 %v1242, %v1305
  %v1307 = vpop.f32.mrb[0].mxu0
  %1308 = vmatprep.mubr.bf16.mxu0 0
  %1309 = vmatmul.mubr.bf16.gmra.mrb[0].mxu0 %v1260
  %v1310 = vpop.f32.mrb[0].mxu0
  %v1311 = vadd.f32 %v1242, %v1310
  %v1312 = vpop.f32.mrb[0].mxu0
  %v1313 = vpop.f32.mrb[0].mxu0
  %v1314 = vadd.f32 %v1242, %v1313
  %v1315 = vpop.f32.mrb[0].mxu0
  %1316 = vmatprep.mubr.bf16.mxu0 0
  %1317 = vmatmul.mubr.bf16.gmra.mrb[0].mxu0 %v1263
  %v1318 = vpop.f32.mrb[0].mxu0
  %v1319 = vadd.f32 %v1242, %v1318
  %v1320 = vpop.f32.mrb[0].mxu0
  %v1321 = vpop.f32.mrb[0].mxu0
  %v1322 = vadd.f32 %v1242, %v1321
  %v1323 = vpop.f32.mrb[0].mxu0
  %1324 = vmatprep.mubr.bf16.mxu0 0
  %1325 = vmatmul.mubr.bf16.gmra.mrb[0].mxu0 %v1266
  %v1326 = vpop.f32.mrb[0].mxu0
  %v1327 = vadd.f32 %v1242, %v1326
  %v1328 = vpop.f32.mrb[0].mxu0
  %v1329 = vpop.f32.mrb[0].mxu0
  %v1330 = vadd.f32 %v1242, %v1329
  %v1331 = vpop.f32.mrb[0].mxu0
  %1332 = vdwg.mxu0
  %v1333 = vpack.c.bf16 %v1306, %v1303
  %v1334 = vpack.c.bf16 %v1314, %v1311
  %v1335 = vpack.c.bf16 %v1322, %v1319
  %v1336 = vpack.c.bf16 %v1330, %v1327
  %v1341 = vunpack.c.l.b16 %v1333
  %v1342 = vunpack.c.h.b16 %v1333
  %v1343 = vunpack.c.l.b16 %v1334
  %v1344 = vunpack.c.h.b16 %v1334
  %v1345 = vunpack.c.l.b16 %v1335
  %v1346 = vunpack.c.h.b16 %v1335
  %v1347 = vunpack.c.l.b16 %v1336
  %v1348 = vunpack.c.h.b16 %v1336
  %v1349 = vpack.c.b16 %v1341, %v1341
  %v1350 = vpack.c.b16 %v1342, %v1342
  %v1351 = vpack.c.b16 %v1343, %v1343
  %v1352 = vpack.c.b16 %v1344, %v1344
  %v1353 = vpack.c.b16 %v1345, %v1345
  %v1354 = vpack.c.b16 %v1346, %v1346
  %v1355 = vpack.c.b16 %v1347, %v1347
  %v1356 = vpack.c.b16 %v1348, %v1348
  %1365 = vst [vmem:[%s9] sm:$0xf] %v1349
  %1366 = vst [vmem:[%s9 + $0x4] sm:$0xf] %v1350
  %1367 = vst [vmem:[%s9 + $0x8] sm:$0xf] %v1351
  %1368 = vst [vmem:[%s9 + $0xc] sm:$0xf] %v1352
  %1369 = vst [vmem:[%s9 + $0x10] sm:$0xf] %v1353
  %1370 = vst [vmem:[%s9 + $0x14] sm:$0xf] %v1354
  %1371 = vst [vmem:[%s9 + $0x18] sm:$0xf] %v1355
  %1372 = vst [vmem:[%s9 + $0x1c] sm:$0xf] %v1356
  // Predicated region
  $region38: #{mlp_resnet_forward.1} parent=0 // pred_check
    _
  $region39: #{mlp_resnet_forward.1} parent=0 // pred_check_branch
    %1374 = sbr.rel (0) target = $region41
  $region40: #{mlp_resnet_forward.1} parent=0 // pred_region
    _
  $region41: #{mlp_resnet_forward.1} parent=0 // pred_fallthru
    _
  // Predicated region
  $region42: #{mlp_resnet_forward.1} parent=0 // pred_check
    _
  $region43: #{mlp_resnet_forward.1} parent=0 // pred_check_branch
    %1376 = sbr.rel (0) target = $region45
  $region44: #{mlp_resnet_forward.1} parent=0 // pred_region
    _
  $region45: #{mlp_resnet_forward.1} parent=0 // pred_fallthru
    _

</llo_original>
